<compile_context>
chip_gen: v7x
topology: tpu7x:2x2x1
jax: 0.10.0
libtpu: 0.0.40
codegen_flags: <defaults>
</compile_context>

<pallas_src>
import numpy as np
import jax
import jax.numpy as jnp
from jax import lax
from jax.experimental import pallas as pl
from jax.experimental.pallas import tpu as pltpu

_LANE = 128


def _round_up(x, m):
    return ((x + m - 1) // m) * m


def _cdiv(a, b):
    return (a + b - 1) // b


def _vmem_params():
    """Chip-aware VMEM working-set budget and explicit scoped-VMEM limit."""
    try:
        cap = int(pltpu.get_tpu_info().vmem_capacity_bytes)
    except Exception:
        cap = 64 << 20                                  # conservative (v7x per-TC)
    cap = max(32 << 20, min(cap, 128 << 20))
    budget = max(12 << 20, cap // 2 - (4 << 20))        # pipeline working-set target
    limit = int(min(cap - (8 << 20), budget + (16 << 20)))
    return budget, limit


def _pad_row(v, n):
    v = v.astype(jnp.float32).reshape(1, -1)
    return jnp.pad(v, ((0, 0), (0, n - v.shape[1])))


# ----------------------------------------------------------------------------
# Hypernetwork: conv weight generation.
#   z_out (Cout,), z_in (Cin,), w1/b1 (Cout,Cin,m), w2 (k2,Cout,Cin,m), b2 (k2,Cout,Cin)
# Output: bf16 (k2*Cin_pad, Cout_pad) with BN scale folded, ready for the conv matmul.
# ----------------------------------------------------------------------------
def _hyper_kernel(zo_ref, zi_ref, w1_ref, b1_ref, w2_ref, b2_ref, scale_ref, w_ref):
    # Cout is the lane axis everywhere; the m reduction is a short unrolled VPU
    # multiply-add chain (no axis=-1 XLU reduction over near-empty vregs).
    latent = zi_ref[...] * zo_ref[...]                  # (cin_pad, blk)
    m = w1_ref.shape[0]
    acc = b2_ref[0]                                     # (cin_pad, blk)
    for mm in range(m):                                 # static, m == embedding_dim
        emb = latent * w1_ref[mm] + b1_ref[mm]
        acc = acc + w2_ref[0, mm] * emb
    # Fold BN scale here so the conv epilogue is only +bias [+res] [+relu].
    w_ref[...] = (acc * scale_ref[...]).astype(w_ref.dtype)


def _pick_hyper_blk(m, cin_pad, cout_pad, budget):
    def need(b):                                        # double-buffered blocks + temps
        return (6 * m + 12) * cin_pad * b * 4
    units = cout_pad // _LANE
    for d in range(units, 0, -1):
        if units % d == 0 and need(d * _LANE) <= budget:
            return d * _LANE
    return _LANE


def hypernet_weight(layer, z_in, *, cin_pad, cout_pad, budget, vmem_limit):
    z_out = layer["latent"].astype(jnp.float32)
    w1, b1, w2, b2 = layer["w1"], layer["b1"], layer["w2"], layer["b2"]
    cout, cin, m = w1.shape
    k2 = w2.shape[0]

    def padcc(a):   # zero-pad the trailing (cin, cout) dims to lane-friendly sizes
        cfg = [(0, 0)] * (a.ndim - 2) + [(0, cin_pad - cin), (0, cout_pad - cout)]
        return jnp.pad(a.astype(jnp.float32), cfg)

    w1t = padcc(jnp.transpose(w1, (2, 1, 0)))           # (m, cin_pad, cout_pad)
    b1t = padcc(jnp.transpose(b1, (2, 1, 0)))
    w2t = padcc(jnp.transpose(w2, (0, 3, 2, 1)))        # (k2, m, cin_pad, cout_pad)
    b2t = padcc(jnp.transpose(b2, (0, 2, 1)))           # (k2, cin_pad, cout_pad)
    zo = jnp.pad(z_out.reshape(1, cout), ((0, 0), (0, cout_pad - cout)))
    zi = jnp.pad(z_in.astype(jnp.float32).reshape(cin, 1),
                 ((0, cin_pad - cin), (0, 0)))
    scale = jnp.pad(layer["bn_scale"].astype(jnp.float32).reshape(1, cout),
                    ((0, 0), (0, cout_pad - cout)))

    blk = _pick_hyper_blk(m, cin_pad, cout_pad, budget)
    nj = cout_pad // blk
    # Grid: cout blocks outer, taps inner -> w1/b1 block indices are constant across
    # the inner axis, so their DMAs are elided after the first tap.
    return pl.pallas_call(
        _hyper_kernel,
        out_shape=jax.ShapeDtypeStruct((k2 * cin_pad, cout_pad), jnp.bfloat16),
        grid=(nj, k2),
        in_specs=[
            pl.BlockSpec((1, blk), lambda j, t: (0, j)),
            pl.BlockSpec((cin_pad, 1), lambda j, t: (0, 0)),
            pl.BlockSpec((m, cin_pad, blk), lambda j, t: (0, 0, j)),
            pl.BlockSpec((m, cin_pad, blk), lambda j, t: (0, 0, j)),
            pl.BlockSpec((1, m, cin_pad, blk), lambda j, t: (t, 0, 0, j)),
            pl.BlockSpec((1, cin_pad, blk), lambda j, t: (t, 0, j)),
            pl.BlockSpec((1, blk), lambda j, t: (0, j)),
        ],
        out_specs=pl.BlockSpec((cin_pad, blk), lambda j, t: (t, j)),
        compiler_params=pltpu.CompilerParams(
            dimension_semantics=("parallel", "arbitrary"),
            vmem_limit_bytes=vmem_limit),
    )(zo, zi, w1t, b1t, w2t, b2t, scale)


# ----------------------------------------------------------------------------
# 1x1 conv (and generic matmul) kernel: (M tile, Kdim) x (Kdim, Cout_pad) with fused
# +bias [+bf16 residual] [+ReLU] epilogue.  Kdim is always a multiple of 128.
# ----------------------------------------------------------------------------
def _make_matmul_kernel(relu, with_res):
    if with_res:
        def kernel(cols_ref, w_ref, bias_ref, res_ref, o_ref):
            y = jnp.dot(cols_ref[...], w_ref[...],
                        preferred_element_type=jnp.float32)
            y = y + bias_ref[...]
            y = y + res_ref[...].astype(jnp.float32)
            if relu:
                y = jnp.maximum(y, 0.0)
            o_ref[...] = y.astype(o_ref.dtype)
    else:
        def kernel(cols_ref, w_ref, bias_ref, o_ref):
            y = jnp.dot(cols_ref[...], w_ref[...],
                        preferred_element_type=jnp.float32)
            y = y + bias_ref[...]
            if relu:
                y = jnp.maximum(y, 0.0)
            o_ref[...] = y.astype(o_ref.dtype)
    return kernel


def _pick_tm(m_rows, kdim, cout_pad, with_res, out_bytes, budget):
    """Largest M tile fitting the VMEM budget; >=4 grid steps; prefers divisors of M."""
    fixed = 2 * kdim * cout_pad * 2 + 2 * 8 * cout_pad * 4     # weight + bias (x2 buf)
    per_row = 2 * kdim * 2 + 2 * cout_pad * out_bytes + cout_pad * 4
    if with_res:
        per_row += 2 * cout_pad * 2                            # bf16 residual stream
    tm = 1024
    while tm > 8 and fixed + tm * per_row > budget:
        tm //= 2
    if m_rows >= 4 * 8:                                        # keep the pipeline /
        tm = min(tm, _round_up(_cdiv(m_rows, 4), 8))           # megacore busy
    tm = max(8, min(tm, _round_up(m_rows, 8)))
    if m_rows % 8 == 0:                                        # avoid padding copy
        t = (min(tm, m_rows) // 8) * 8
        lo = max(8, t // 2)
        while t >= lo:
            if m_rows % t == 0:
                return t, m_rows
            t -= 8
    return tm, _round_up(m_rows, tm)


def _conv_matmul(cols, w_mm, bias, *, relu, residual=None, out_dtype,
                 budget, vmem_limit):
    m_rows, kdim = cols.shape
    cout_pad = w_mm.shape[1]
    out_bytes = jnp.dtype(out_dtype).itemsize
    tm, m_pad = _pick_tm(m_rows, kdim, cout_pad, residual is not None,
                         out_bytes, budget)
    if m_pad != m_rows:
        cols = jnp.pad(cols, ((0, m_pad - m_rows), (0, 0)))
        if residual is not None:
            residual = jnp.pad(residual, ((0, m_pad - m_rows), (0, 0)))

    in_specs = [
        pl.BlockSpec((tm, kdim), lambda i: (i, 0)),
        pl.BlockSpec((kdim, cout_pad), lambda i: (0, 0)),
        pl.BlockSpec((1, cout_pad), lambda i: (0, 0)),
    ]
    args = [cols, w_mm, bias]
    if residual is not None:
        in_specs.append(pl.BlockSpec((tm, cout_pad), lambda i: (i, 0)))
        args.append(residual)

    out = pl.pallas_call(
        _make_matmul_kernel(relu, residual is not None),
        out_shape=jax.ShapeDtypeStruct((m_pad, cout_pad), out_dtype),
        grid=(m_pad // tm,),
        in_specs=in_specs,
        out_specs=pl.BlockSpec((tm, cout_pad), lambda i: (i, 0)),
        compiler_params=pltpu.CompilerParams(
            dimension_semantics=("parallel",),
            vmem_limit_bytes=vmem_limit),
    )(*args)
    if m_pad != m_rows:
        out = out[:m_rows]
    return out


# ----------------------------------------------------------------------------
# kxk conv, stride 1: streaming im2col.  Grid over batch images; the halo'd padded
# image block is DMA'd once per image and the k*k taps are sliced & matmul'd in VMEM,
# so no 9x im2col buffer is ever written to HBM.
# ----------------------------------------------------------------------------
def _make_conv_kxk_kernel(k, ho, wo, cin_pad, relu):
    def kernel(xp_ref, w_ref, bias_ref, o_ref):
        cout = o_ref.shape[-1]
        acc = jnp.zeros((ho * wo, cout), jnp.float32)
        for dy in range(k):                       # static unrolled taps
            for dx in range(k):
                t = dy * k + dx
                patch = xp_ref[0, dy:dy + ho, dx:dx + wo, :]
                patch = patch.reshape(ho * wo, cin_pad)
                acc = acc + jnp.dot(
                    patch, w_ref[t * cin_pad:(t + 1) * cin_pad, :],
                    preferred_element_type=jnp.float32)
        y = acc + bias_ref[...]
        if relu:
            y = jnp.maximum(y, 0.0)
        o_ref[...] = y.reshape(1, ho, wo, cout).astype(o_ref.dtype)
    return kernel


def conv_kxk(x_nhwc, w_mm, bias, *, k, stride, relu, out_dtype, budget, vmem_limit):
    n, h, w, cin_pad = x_nhwc.shape
    kdim, cout_pad = w_mm.shape
    pad = k // 2
    ho = (h + 2 * pad - k) // stride + 1
    wo = (w + 2 * pad - k) // stride + 1

    if k == 1 and stride == 1:
        out = _conv_matmul(x_nhwc.reshape(n * h * w, cin_pad), w_mm, bias,
                           relu=relu, out_dtype=out_dtype,
                           budget=budget, vmem_limit=vmem_limit)
        return out.reshape(n, ho, wo, cout_pad), ho, wo

    xp = jnp.pad(x_nhwc, ((0, 0), (pad, pad), (pad, pad), (0, 0)))
    hp, wp = h + 2 * pad, w + 2 * pad
    out_bytes = jnp.dtype(out_dtype).itemsize

    est = (2 * hp * wp * cin_pad * 2 + 2 * kdim * cout_pad * 2
           + 2 * ho * wo * cout_pad * out_bytes
           + ho * wo * cout_pad * 4 + 2 * ho * wo * cin_pad * 2)
    if stride == 1 and est <= budget:
        out = pl.pallas_call(
            _make_conv_kxk_kernel(k, ho, wo, cin_pad, relu),
            out_shape=jax.ShapeDtypeStruct((n, ho, wo, cout_pad), out_dtype),
            grid=(n,),
            in_specs=[
                pl.BlockSpec((1, hp, wp, cin_pad), lambda i: (i, 0, 0, 0)),
                pl.BlockSpec((kdim, cout_pad), lambda i: (0, 0)),
                pl.BlockSpec((1, cout_pad), lambda i: (0, 0)),
            ],
            out_specs=pl.BlockSpec((1, ho, wo, cout_pad), lambda i: (i, 0, 0, 0)),
            compiler_params=pltpu.CompilerParams(
                dimension_semantics=("parallel",),
                vmem_limit_bytes=vmem_limit),
        )(xp, w_mm, bias)
        return out, ho, wo

    # TODO(synk): stride>1 / oversized-image 3x3 still falls back to host im2col;
    # a row-tiled halo kernel would remove this too.
    patches = []
    for dy in range(k):
        for dx in range(k):
            patches.append(xp[:, dy:dy + (ho - 1) * stride + 1:stride,
                               dx:dx + (wo - 1) * stride + 1:stride, :])
    cols = jnp.concatenate(patches, axis=-1).reshape(n * ho * wo, kdim)
    out = _conv_matmul(cols, w_mm, bias, relu=relu, out_dtype=out_dtype,
                       budget=budget, vmem_limit=vmem_limit)
    return out.reshape(n, ho, wo, cout_pad), ho, wo


# ----------------------------------------------------------------------------
# Parameter init (deterministic, shapes follow conv_dhp.__init__).
# ----------------------------------------------------------------------------
def init_conv_dhp_params(key, in_c, out_c, k, m):
    ks = jax.random.split(key, 5)
    eps = 1e-5
    return dict(
        latent=jax.random.normal(ks[0], (out_c,), jnp.float32),
        w1=0.1 * jax.random.normal(ks[1], (out_c, in_c, m), jnp.float32),
        b1=0.1 * jax.random.normal(ks[2], (out_c, in_c, m), jnp.float32),
        w2=0.1 * jax.random.normal(ks[3], (k * k, out_c, in_c, m), jnp.float32),
        b2=0.1 * jax.random.normal(ks[4], (k * k, out_c, in_c), jnp.float32),
        bn_scale=jnp.full((out_c,), 1.0 / np.sqrt(1.0 + eps), jnp.float32),
        bn_bias=jnp.zeros((out_c,), jnp.float32),
    )


def init_bottleneck_params(key, in_channels, planes, kernel_size, embedding_dim):
    expansion = 4
    k1, k2, k3 = jax.random.split(key, 3)
    return dict(
        layer1=init_conv_dhp_params(k1, in_channels, planes, 1, embedding_dim),
        layer2=init_conv_dhp_params(k2, planes, planes, kernel_size, embedding_dim),
        layer3=init_conv_dhp_params(k3, planes, expansion * planes, 1, embedding_dim),
    )


# ----------------------------------------------------------------------------
# BottleNeck_dhp forward (not-finetuning path, downsample=None).
# ----------------------------------------------------------------------------
def bottleneck_dhp_forward(params, x_nchw, latent_input_vector, *, kernel_size,
                           stride):
    budget, vmem_limit = _vmem_params()

    n, cin, h, w = x_nchw.shape
    l1, l2, l3 = params["layer1"], params["layer2"], params["layer3"]
    planes = int(l1["latent"].shape[0])
    cout3 = int(l3["latent"].shape[0])

    cin_pad = _round_up(cin, _LANE)
    planes_pad = _round_up(planes, _LANE)
    cout3_pad = _round_up(cout3, _LANE)

    # NCHW -> NHWC bf16, channels zero-padded to a lane multiple (one fused pass).
    # TODO(synk): an NHWC-native entry point would remove these two transposes.
    x_nhwc = jnp.transpose(x_nchw, (0, 2, 3, 1)).astype(jnp.bfloat16)
    x_p = jnp.pad(x_nhwc, ((0, 0), (0, 0), (0, 0), (0, cin_pad - cin)))

    # layer1: 1x1 conv + BN + ReLU
    w1 = hypernet_weight(l1, latent_input_vector, cin_pad=cin_pad,
                         cout_pad=planes_pad, budget=budget, vmem_limit=vmem_limit)
    b1 = _pad_row(l1["bn_bias"], planes_pad)
    out1 = _conv_matmul(x_p.reshape(n * h * w, cin_pad), w1, b1, relu=True,
                        out_dtype=jnp.bfloat16, budget=budget,
                        vmem_limit=vmem_limit)

    # layer2: kxk conv (stride) + BN + ReLU, im2col streamed in VMEM
    w2 = hypernet_weight(l2, l1["latent"], cin_pad=planes_pad,
                         cout_pad=planes_pad, budget=budget, vmem_limit=vmem_limit)
    b2 = _pad_row(l2["bn_bias"], planes_pad)
    out2, ho, wo = conv_kxk(out1.reshape(n, h, w, planes_pad), w2, b2,
                            k=kernel_size, stride=stride, relu=True,
                            out_dtype=jnp.bfloat16, budget=budget,
                            vmem_limit=vmem_limit)

    # layer3: 1x1 conv + BN (act=False), fused with the block's residual add + ReLU.
    w3 = hypernet_weight(l3, l2["latent"], cin_pad=planes_pad,
                         cout_pad=cout3_pad, budget=budget, vmem_limit=vmem_limit)
    b3 = _pad_row(l3["bn_bias"], cout3_pad)
    residual = None
    if stride == 1 and cin == cout3:
        residual = x_p.reshape(n * h * w, cin_pad)      # bf16, already channel-padded
    # TODO(synk): downsample (projection shortcut / stride>1) branch not implemented.
    out3 = _conv_matmul(out2.reshape(n * ho * wo, planes_pad), w3, b3, relu=True,
                        residual=residual, out_dtype=jnp.float32,
                        budget=budget, vmem_limit=vmem_limit)

    out = out3.reshape(n, ho, wo, cout3_pad)[:, :, :, :cout3]
    return jnp.transpose(out, (0, 3, 1, 2))             # back to NCHW


# ----------------------------------------------------------------------------
# Pure-JAX f32 reference (for correctness check only).
# ----------------------------------------------------------------------------
def _hypernet_ref(z_out, z_in, w1, b1, w2, b2):
    latent = z_out[:, None] * z_in[None, :]
    emb = latent[:, :, None] * w1 + b1
    return jnp.einsum("toim,oim->toi", w2, emb) + b2


def _conv_ref(x, weight, scale, bias, *, k, stride, relu, residual=None):
    k2, cout, cin = weight.shape
    w_hwio = jnp.transpose(weight.reshape(k, k, cout, cin), (0, 1, 3, 2))
    y = lax.conv_general_dilated(x, w_hwio, (stride, stride),
                                 [(k // 2, k // 2)] * 2,
                                 dimension_numbers=("NHWC", "HWIO", "NHWC"),
                                 precision=lax.Precision.HIGHEST)
    y = y * scale.reshape(1, 1, 1, cout) + bias.reshape(1, 1, 1, cout)
    if residual is not None:
        y = y + residual
    if relu:
        y = jnp.maximum(y, 0.0)
    return y


def bottleneck_dhp_reference(params, x_nchw, z_in, *, kernel_size, stride):
    x = jnp.transpose(x_nchw, (0, 2, 3, 1)).astype(jnp.float32)
    l1, l2, l3 = params["layer1"], params["layer2"], params["layer3"]
    w1 = _hypernet_ref(l1["latent"], z_in, l1["w1"], l1["b1"], l1["w2"], l1["b2"])
    out = _conv_ref(x, w1, l1["bn_scale"], l1["bn_bias"], k=1, stride=1, relu=True)
    w2 = _hypernet_ref(l2["latent"], l1["latent"], l2["w1"], l2["b1"], l2["w2"], l2["b2"])
    out = _conv_ref(out, w2, l2["bn_scale"], l2["bn_bias"], k=kernel_size,
                    stride=stride, relu=True)
    w3 = _hypernet_ref(l3["latent"], l2["latent"], l3["w1"], l3["b1"], l3["w2"], l3["b2"])
    out = _conv_ref(out, w3, l3["bn_scale"], l3["bn_bias"], k=1, stride=1,
                    relu=True, residual=x)
    return jnp.transpose(out, (0, 3, 1, 2))


if __name__ == "__main__":
    # Small config: in_channels = expansion * planes so the identity skip is valid
    # (stride=1, downsample=None), matching BottleNeck_dhp semantics.
    N, H, W = 2, 16, 16
    planes, expansion = 4, 4
    in_channels = expansion * planes          # 16
    kernel_size, stride, embedding_dim = 3, 1, 8

    root = jax.random.PRNGKey(0)
    kp, kx, kz = jax.random.split(root, 3)
    params = init_bottleneck_params(kp, in_channels, planes, kernel_size,
                                    embedding_dim)
    x = jax.random.normal(kx, (N, in_channels, H, W), jnp.float32)       # NCHW
    latent_input_vector = jax.random.normal(kz, (in_channels,), jnp.float32)

    out = bottleneck_dhp_forward(params, x, latent_input_vector,
                                 kernel_size=kernel_size, stride=stride)
    out = jax.block_until_ready(out)
    assert out.shape == (N, expansion * planes, H, W)

    ref = bottleneck_dhp_reference(params, x, latent_input_vector,
                                   kernel_size=kernel_size, stride=stride)
    # Tolerance relaxed vs. the f32 reference: bf16 MXU operands, bf16 intermediate
    # activations and a bf16 residual stream (f32 accumulation everywhere).
    np.testing.assert_allclose(np.asarray(out), np.asarray(ref),
                               rtol=3e-2, atol=3e-2)
    print("KERNEL_OK")
</pallas_src>

<mosaic_0001>
module attributes {stable_mosaic.version = 11 : i64} {
  func.func @_hyper_kernel(%arg0: i32, %arg1: i32, %arg2: memref<1x128xf32, #tpu.memory_space<vmem>>, %arg3: memref<128x1xf32, #tpu.memory_space<vmem>>, %arg4: memref<8x128x128xf32, #tpu.memory_space<vmem>>, %arg5: memref<8x128x128xf32, #tpu.memory_space<vmem>>, %arg6: memref<1x8x128x128xf32, #tpu.memory_space<vmem>>, %arg7: memref<1x128x128xf32, #tpu.memory_space<vmem>>, %arg8: memref<1x128xf32, #tpu.memory_space<vmem>>, %arg9: memref<128x128xbf16, #tpu.memory_space<vmem>>) attributes {dimension_semantics = [#tpu.dimension_semantics<parallel>, #tpu.dimension_semantics<arbitrary>], iteration_bounds = array<i64: 1, 1>, scalar_prefetch = 0 : i64, scratch_operands = 0 : i64, tpu.core_type = #tpu.core_type<tc>, window_params = [{transform_indices = @transform_0, window_bounds = array<i64: 1, 128>}, {pipeline_mode = #tpu.pipeline_mode<synchronous>, transform_indices = @transform_1, window_bounds = array<i64: 128, 1>}, {transform_indices = @transform_2, window_bounds = array<i64: 8, 128, 128>}, {transform_indices = @transform_3, window_bounds = array<i64: 8, 128, 128>}, {transform_indices = @transform_4, window_bounds = array<i64: 1, 8, 128, 128>}, {transform_indices = @transform_5, window_bounds = array<i64: 1, 128, 128>}, {transform_indices = @transform_6, window_bounds = array<i64: 1, 128>}, {transform_indices = @transform_7, window_bounds = array<i64: 128, 128>}]} {
    %c0 = arith.constant 0 : index
    %c0_0 = arith.constant 0 : index
    %0 = vector.load %arg3[%c0, %c0_0] : memref<128x1xf32, #tpu.memory_space<vmem>>, vector<128x1xf32>
    %c0_1 = arith.constant 0 : index
    %c0_2 = arith.constant 0 : index
    %1 = vector.load %arg2[%c0_1, %c0_2] : memref<1x128xf32, #tpu.memory_space<vmem>>, vector<1x128xf32>
    %2 = vector.broadcast %0 : vector<128x1xf32> to vector<128x128xf32>
    %3 = vector.broadcast %1 : vector<1x128xf32> to vector<128x128xf32>
    %4 = arith.mulf %2, %3 : vector<128x128xf32>
    %c0_3 = arith.constant 0 : index
    %c0_4 = arith.constant 0 : index
    %c0_5 = arith.constant 0 : index
    %5 = vector.load %arg7[%c0_3, %c0_4, %c0_5] : memref<1x128x128xf32, #tpu.memory_space<vmem>>, vector<1x128x128xf32>
    %6 = vector.shape_cast %5 : vector<1x128x128xf32> to vector<128x128xf32>
    %c0_6 = arith.constant 0 : index
    %c0_7 = arith.constant 0 : index
    %c0_8 = arith.constant 0 : index
    %7 = vector.load %arg4[%c0_6, %c0_7, %c0_8] : memref<8x128x128xf32, #tpu.memory_space<vmem>>, vector<1x128x128xf32>
    %8 = vector.shape_cast %7 : vector<1x128x128xf32> to vector<128x128xf32>
    %9 = arith.mulf %4, %8 : vector<128x128xf32>
    %c0_9 = arith.constant 0 : index
    %c0_10 = arith.constant 0 : index
    %c0_11 = arith.constant 0 : index
    %10 = vector.load %arg5[%c0_9, %c0_10, %c0_11] : memref<8x128x128xf32, #tpu.memory_space<vmem>>, vector<1x128x128xf32>
    %11 = vector.shape_cast %10 : vector<1x128x128xf32> to vector<128x128xf32>
    %12 = arith.addf %9, %11 : vector<128x128xf32>
    %c0_12 = arith.constant 0 : index
    %c0_13 = arith.constant 0 : index
    %c0_14 = arith.constant 0 : index
    %c0_15 = arith.constant 0 : index
    %13 = vector.load %arg6[%c0_12, %c0_13, %c0_14, %c0_15] : memref<1x8x128x128xf32, #tpu.memory_space<vmem>>, vector<1x1x128x128xf32>
    %14 = vector.shape_cast %13 : vector<1x1x128x128xf32> to vector<128x128xf32>
    %15 = arith.mulf %14, %12 : vector<128x128xf32>
    %16 = arith.addf %6, %15 : vector<128x128xf32>
    %c1 = arith.constant 1 : index
    %c0_16 = arith.constant 0 : index
    %c0_17 = arith.constant 0 : index
    %17 = vector.load %arg4[%c1, %c0_16, %c0_17] : memref<8x128x128xf32, #tpu.memory_space<vmem>>, vector<1x128x128xf32>
    %18 = vector.shape_cast %17 : vector<1x128x128xf32> to vector<128x128xf32>
    %19 = arith.mulf %4, %18 : vector<128x128xf32>
    %c1_18 = arith.constant 1 : index
    %c0_19 = arith.constant 0 : index
    %c0_20 = arith.constant 0 : index
    %20 = vector.load %arg5[%c1_18, %c0_19, %c0_20] : memref<8x128x128xf32, #tpu.memory_space<vmem>>, vector<1x128x128xf32>
    %21 = vector.shape_cast %20 : vector<1x128x128xf32> to vector<128x128xf32>
    %22 = arith.addf %19, %21 : vector<128x128xf32>
    %c0_21 = arith.constant 0 : index
    %c1_22 = arith.constant 1 : index
    %c0_23 = arith.constant 0 : index
    %c0_24 = arith.constant 0 : index
    %23 = vector.load %arg6[%c0_21, %c1_22, %c0_23, %c0_24] : memref<1x8x128x128xf32, #tpu.memory_space<vmem>>, vector<1x1x128x128xf32>
    %24 = vector.shape_cast %23 : vector<1x1x128x128xf32> to vector<128x128xf32>
    %25 = arith.mulf %24, %22 : vector<128x128xf32>
    %26 = arith.addf %16, %25 : vector<128x128xf32>
    %c2 = arith.constant 2 : index
    %c0_25 = arith.constant 0 : index
    %c0_26 = arith.constant 0 : index
    %27 = vector.load %arg4[%c2, %c0_25, %c0_26] : memref<8x128x128xf32, #tpu.memory_space<vmem>>, vector<1x128x128xf32>
    %28 = vector.shape_cast %27 : vector<1x128x128xf32> to vector<128x128xf32>
    %29 = arith.mulf %4, %28 : vector<128x128xf32>
    %c2_27 = arith.constant 2 : index
    %c0_28 = arith.constant 0 : index
    %c0_29 = arith.constant 0 : index
    %30 = vector.load %arg5[%c2_27, %c0_28, %c0_29] : memref<8x128x128xf32, #tpu.memory_space<vmem>>, vector<1x128x128xf32>
    %31 = vector.shape_cast %30 : vector<1x128x128xf32> to vector<128x128xf32>
    %32 = arith.addf %29, %31 : vector<128x128xf32>
    %c0_30 = arith.constant 0 : index
    %c2_31 = arith.constant 2 : index
    %c0_32 = arith.constant 0 : index
    %c0_33 = arith.constant 0 : index
    %33 = vector.load %arg6[%c0_30, %c2_31, %c0_32, %c0_33] : memref<1x8x128x128xf32, #tpu.memory_space<vmem>>, vector<1x1x128x128xf32>
    %34 = vector.shape_cast %33 : vector<1x1x128x128xf32> to vector<128x128xf32>
    %35 = arith.mulf %34, %32 : vector<128x128xf32>
    %36 = arith.addf %26, %35 : vector<128x128xf32>
    %c3 = arith.constant 3 : index
    %c0_34 = arith.constant 0 : index
    %c0_35 = arith.constant 0 : index
    %37 = vector.load %arg4[%c3, %c0_34, %c0_35] : memref<8x128x128xf32, #tpu.memory_space<vmem>>, vector<1x128x128xf32>
    %38 = vector.shape_cast %37 : vector<1x128x128xf32> to vector<128x128xf32>
    %39 = arith.mulf %4, %38 : vector<128x128xf32>
    %c3_36 = arith.constant 3 : index
    %c0_37 = arith.constant 0 : index
    %c0_38 = arith.constant 0 : index
    %40 = vector.load %arg5[%c3_36, %c0_37, %c0_38] : memref<8x128x128xf32, #tpu.memory_space<vmem>>, vector<1x128x128xf32>
    %41 = vector.shape_cast %40 : vector<1x128x128xf32> to vector<128x128xf32>
    %42 = arith.addf %39, %41 : vector<128x128xf32>
    %c0_39 = arith.constant 0 : index
    %c3_40 = arith.constant 3 : index
    %c0_41 = arith.constant 0 : index
    %c0_42 = arith.constant 0 : index
    %43 = vector.load %arg6[%c0_39, %c3_40, %c0_41, %c0_42] : memref<1x8x128x128xf32, #tpu.memory_space<vmem>>, vector<1x1x128x128xf32>
    %44 = vector.shape_cast %43 : vector<1x1x128x128xf32> to vector<128x128xf32>
    %45 = arith.mulf %44, %42 : vector<128x128xf32>
    %46 = arith.addf %36, %45 : vector<128x128xf32>
    %c4 = arith.constant 4 : index
    %c0_43 = arith.constant 0 : index
    %c0_44 = arith.constant 0 : index
    %47 = vector.load %arg4[%c4, %c0_43, %c0_44] : memref<8x128x128xf32, #tpu.memory_space<vmem>>, vector<1x128x128xf32>
    %48 = vector.shape_cast %47 : vector<1x128x128xf32> to vector<128x128xf32>
    %49 = arith.mulf %4, %48 : vector<128x128xf32>
    %c4_45 = arith.constant 4 : index
    %c0_46 = arith.constant 0 : index
    %c0_47 = arith.constant 0 : index
    %50 = vector.load %arg5[%c4_45, %c0_46, %c0_47] : memref<8x128x128xf32, #tpu.memory_space<vmem>>, vector<1x128x128xf32>
    %51 = vector.shape_cast %50 : vector<1x128x128xf32> to vector<128x128xf32>
    %52 = arith.addf %49, %51 : vector<128x128xf32>
    %c0_48 = arith.constant 0 : index
    %c4_49 = arith.constant 4 : index
    %c0_50 = arith.constant 0 : index
    %c0_51 = arith.constant 0 : index
    %53 = vector.load %arg6[%c0_48, %c4_49, %c0_50, %c0_51] : memref<1x8x128x128xf32, #tpu.memory_space<vmem>>, vector<1x1x128x128xf32>
    %54 = vector.shape_cast %53 : vector<1x1x128x128xf32> to vector<128x128xf32>
    %55 = arith.mulf %54, %52 : vector<128x128xf32>
    %56 = arith.addf %46, %55 : vector<128x128xf32>
    %c5 = arith.constant 5 : index
    %c0_52 = arith.constant 0 : index
    %c0_53 = arith.constant 0 : index
    %57 = vector.load %arg4[%c5, %c0_52, %c0_53] : memref<8x128x128xf32, #tpu.memory_space<vmem>>, vector<1x128x128xf32>
    %58 = vector.shape_cast %57 : vector<1x128x128xf32> to vector<128x128xf32>
    %59 = arith.mulf %4, %58 : vector<128x128xf32>
    %c5_54 = arith.constant 5 : index
    %c0_55 = arith.constant 0 : index
    %c0_56 = arith.constant 0 : index
    %60 = vector.load %arg5[%c5_54, %c0_55, %c0_56] : memref<8x128x128xf32, #tpu.memory_space<vmem>>, vector<1x128x128xf32>
    %61 = vector.shape_cast %60 : vector<1x128x128xf32> to vector<128x128xf32>
    %62 = arith.addf %59, %61 : vector<128x128xf32>
    %c0_57 = arith.constant 0 : index
    %c5_58 = arith.constant 5 : index
    %c0_59 = arith.constant 0 : index
    %c0_60 = arith.constant 0 : index
    %63 = vector.load %arg6[%c0_57, %c5_58, %c0_59, %c0_60] : memref<1x8x128x128xf32, #tpu.memory_space<vmem>>, vector<1x1x128x128xf32>
    %64 = vector.shape_cast %63 : vector<1x1x128x128xf32> to vector<128x128xf32>
    %65 = arith.mulf %64, %62 : vector<128x128xf32>
    %66 = arith.addf %56, %65 : vector<128x128xf32>
    %c6 = arith.constant 6 : index
    %c0_61 = arith.constant 0 : index
    %c0_62 = arith.constant 0 : index
    %67 = vector.load %arg4[%c6, %c0_61, %c0_62] : memref<8x128x128xf32, #tpu.memory_space<vmem>>, vector<1x128x128xf32>
    %68 = vector.shape_cast %67 : vector<1x128x128xf32> to vector<128x128xf32>
    %69 = arith.mulf %4, %68 : vector<128x128xf32>
    %c6_63 = arith.constant 6 : index
    %c0_64 = arith.constant 0 : index
    %c0_65 = arith.constant 0 : index
    %70 = vector.load %arg5[%c6_63, %c0_64, %c0_65] : memref<8x128x128xf32, #tpu.memory_space<vmem>>, vector<1x128x128xf32>
    %71 = vector.shape_cast %70 : vector<1x128x128xf32> to vector<128x128xf32>
    %72 = arith.addf %69, %71 : vector<128x128xf32>
    %c0_66 = arith.constant 0 : index
    %c6_67 = arith.constant 6 : index
    %c0_68 = arith.constant 0 : index
    %c0_69 = arith.constant 0 : index
    %73 = vector.load %arg6[%c0_66, %c6_67, %c0_68, %c0_69] : memref<1x8x128x128xf32, #tpu.memory_space<vmem>>, vector<1x1x128x128xf32>
    %74 = vector.shape_cast %73 : vector<1x1x128x128xf32> to vector<128x128xf32>
    %75 = arith.mulf %74, %72 : vector<128x128xf32>
    %76 = arith.addf %66, %75 : vector<128x128xf32>
    %c7 = arith.constant 7 : index
    %c0_70 = arith.constant 0 : index
    %c0_71 = arith.constant 0 : index
    %77 = vector.load %arg4[%c7, %c0_70, %c0_71] : memref<8x128x128xf32, #tpu.memory_space<vmem>>, vector<1x128x128xf32>
    %78 = vector.shape_cast %77 : vector<1x128x128xf32> to vector<128x128xf32>
    %79 = arith.mulf %4, %78 : vector<128x128xf32>
    %c7_72 = arith.constant 7 : index
    %c0_73 = arith.constant 0 : index
    %c0_74 = arith.constant 0 : index
    %80 = vector.load %arg5[%c7_72, %c0_73, %c0_74] : memref<8x128x128xf32, #tpu.memory_space<vmem>>, vector<1x128x128xf32>
    %81 = vector.shape_cast %80 : vector<1x128x128xf32> to vector<128x128xf32>
    %82 = arith.addf %79, %81 : vector<128x128xf32>
    %c0_75 = arith.constant 0 : index
    %c7_76 = arith.constant 7 : index
    %c0_77 = arith.constant 0 : index
    %c0_78 = arith.constant 0 : index
    %83 = vector.load %arg6[%c0_75, %c7_76, %c0_77, %c0_78] : memref<1x8x128x128xf32, #tpu.memory_space<vmem>>, vector<1x1x128x128xf32>
    %84 = vector.shape_cast %83 : vector<1x1x128x128xf32> to vector<128x128xf32>
    %85 = arith.mulf %84, %82 : vector<128x128xf32>
    %86 = arith.addf %76, %85 : vector<128x128xf32>
    %c0_79 = arith.constant 0 : index
    %c0_80 = arith.constant 0 : index
    %87 = vector.load %arg8[%c0_79, %c0_80] : memref<1x128xf32, #tpu.memory_space<vmem>>, vector<1x128xf32>
    %88 = vector.broadcast %87 : vector<1x128xf32> to vector<128x128xf32>
    %89 = arith.mulf %86, %88 : vector<128x128xf32>
    %90 = arith.truncf %89 : vector<128x128xf32> to vector<128x128xbf16>
    %c0_81 = arith.constant 0 : index
    %c0_82 = arith.constant 0 : index
    %91 = vector.load %arg9[%c0_81, %c0_82] : memref<128x128xbf16, #tpu.memory_space<vmem>>, vector<128x128xbf16>
    tpu.vector_store %arg9[%c0_81, %c0_82], %90 {strides = array<i32>} : memref<128x128xbf16, #tpu.memory_space<vmem>>, vector<128x128xbf16>,
    return
  }
  func.func @transform_0(%arg0: i32, %arg1: i32) -> (i32, i32) {
    %c0_i32 = arith.constant 0 : i32
    %c0_i32_0 = arith.constant 0 : i32
    return %c0_i32, %arg0 : i32, i32
  }
  func.func @transform_1(%arg0: i32, %arg1: i32) -> (i32, i32) {
    %c0_i32 = arith.constant 0 : i32
    %c0_i32_0 = arith.constant 0 : i32
    %c0_i32_1 = arith.constant 0 : i32
    return %c0_i32, %c0_i32_0 : i32, i32
  }
  func.func @transform_2(%arg0: i32, %arg1: i32) -> (i32, i32, i32) {
    %c0_i32 = arith.constant 0 : i32
    %c0_i32_0 = arith.constant 0 : i32
    %c0_i32_1 = arith.constant 0 : i32
    return %c0_i32, %c0_i32_0, %arg0 : i32, i32, i32
  }
  func.func @transform_3(%arg0: i32, %arg1: i32) -> (i32, i32, i32) {
    %c0_i32 = arith.constant 0 : i32
    %c0_i32_0 = arith.constant 0 : i32
    %c0_i32_1 = arith.constant 0 : i32
    return %c0_i32, %c0_i32_0, %arg0 : i32, i32, i32
  }
  func.func @transform_4(%arg0: i32, %arg1: i32) -> (i32, i32, i32, i32) {
    %c0_i32 = arith.constant 0 : i32
    %c0_i32_0 = arith.constant 0 : i32
    %c0_i32_1 = arith.constant 0 : i32
    return %arg1, %c0_i32, %c0_i32_0, %arg0 : i32, i32, i32, i32
  }
  func.func @transform_5(%arg0: i32, %arg1: i32) -> (i32, i32, i32) {
    %c0_i32 = arith.constant 0 : i32
    %c0_i32_0 = arith.constant 0 : i32
    return %arg1, %c0_i32, %arg0 : i32, i32, i32
  }
  func.func @transform_6(%arg0: i32, %arg1: i32) -> (i32, i32) {
    %c0_i32 = arith.constant 0 : i32
    %c0_i32_0 = arith.constant 0 : i32
    return %c0_i32, %arg0 : i32, i32
  }
  func.func @transform_7(%arg0: i32, %arg1: i32) -> (i32, i32) {
    %c0_i32 = arith.constant 0 : i32
    return %arg1, %arg0 : i32, i32
  }
}

</mosaic_0001>

<llo_original>
// kernel: tpu_custom_call.1
$region0: #{tpu_custom_call.1}
  #allocation0 [shape = 'u32[]', space=smem, size = 0x4, offset = 0x4, fixed_abs, tag = 'smem constant byte address 0x4 - core index']
  #allocation1 [shape = 'u32[144,128]{1,0:T(1,128)}', space=vmem, size = 0x12000, scoped, tag = 'internal scratch']
  %s0 = inlined_call_operand.vmem [shape: f32[1,128], index: 0, kind: input, shape index: {}]
  %s1 = inlined_call_operand.vmem [shape: f32[128,1], index: 1, kind: input, shape index: {}]
  %s2 = inlined_call_operand.hbm [shape: f32[8,128,128], index: 2, kind: input, shape index: {}]
  %s3 = inlined_call_operand.hbm [shape: f32[8,128,128], index: 3, kind: input, shape index: {}]
  %s4 = inlined_call_operand.hbm [shape: f32[1,8,128,128], index: 4, kind: input, shape index: {}]
  %s5 = inlined_call_operand.vmem [shape: f32[1,128,128], index: 5, kind: input, shape index: {}]
  %s6 = inlined_call_operand.vmem [shape: f32[1,128], index: 6, kind: input, shape index: {}]
  %s7 = inlined_call_operand.hbm [shape: bf16[128,128], index: 7, kind: output, shape index: {}]
  %s8 = sld [smem:[#allocation0]]
  $region50: #{tpu_custom_call.1} parent=0
    _
  %s10 = ssub.s32 1, %s8
  %s11 = scalar_select 0, %s10, %s8
  $region1: #{tpu_custom_call.1} parent=0
    #allocation2 [shape = 'u8[524288]{0}', space=vmem, size = 0x80000, scoped, tag = 'input window, operand 2, single buffered']
    #allocation3 [shape = 's32[1]{0}', space=sflag, size = 0x4, scoped, tag = 'scoped memory for tpu_custom_call.1']
    #allocation4 [shape = 's32[1]{0}', space=sflag, size = 0x4, scoped, tag = 'scoped memory for tpu_custom_call.1']
    #allocation5 [shape = 'u8[524288]{0}', space=vmem, size = 0x80000, scoped, tag = 'input window, operand 3, single buffered']
    #allocation6 [shape = 's32[1]{0}', space=sflag, size = 0x4, scoped, tag = 'scoped memory for tpu_custom_call.1']
    #allocation7 [shape = 'u8[524288]{0}', space=vmem, size = 0x80000, scoped, tag = 'input window, operand 4, single buffered']
    #allocation8 [shape = 'u8[32768]{0}', space=vmem, size = 0x8000, scoped, tag = 'output window, operand 0, single buffered']
    %12 = vsyncpa [#allocation3], 0
    %13 = vsyncpa [#allocation6], 0
    %14 = vsyncpa [#allocation4], 0
    // Predicated region
    $region2: #{tpu_custom_call.1} parent=1 // pred_check
      _
    $region3: #{tpu_custom_call.1} parent=1 // pred_check_branch
      %16 = sbr.rel (0) target = $region5
    $region4: #{tpu_custom_call.1} parent=1 // pred_region
      _
    $region5: #{tpu_custom_call.1} parent=1 // pred_fallthru
      _
    // Predicated region
    $region6: #{tpu_custom_call.1} parent=1 // pred_check
      _
    $region7: #{tpu_custom_call.1} parent=1 // pred_check_branch
      %18 = sbr.rel (0) target = $region9
    $region8: #{tpu_custom_call.1} parent=1 // pred_region
      _
    $region9: #{tpu_custom_call.1} parent=1 // pred_fallthru
      _
    // Predicated region
    $region10: #{tpu_custom_call.1} parent=1 // pred_check
      _
    $region11: #{tpu_custom_call.1} parent=1 // pred_check_branch
      %20 = sbr.rel (0) target = $region13
    $region12: #{tpu_custom_call.1} parent=1 // pred_region
      %s22 = ssub.s32 16384, 16384
      %23 = vsyncadd [#allocation3], %s22
      %s24 = sshll.u32 [#allocation2], 4
      %s25 = int_to_ptr.vmem [resolvable:$true] %s24
      %30 = dma.hbm_to_vmem [thread:$0]  %s2, 16384, %s25, [#allocation3], 128, 128, 8
    $region13: #{tpu_custom_call.1} parent=1 // pred_fallthru
      _
    // Predicated region
    $region14: #{tpu_custom_call.1} parent=1 // pred_check
      _
    $region15: #{tpu_custom_call.1} parent=1 // pred_check_branch
      %32 = sbr.rel (0) target = $region17
    $region16: #{tpu_custom_call.1} parent=1 // pred_region
      %s34 = ssub.s32 16384, 16384
      %35 = vsyncadd [#allocation6], %s34
      %s36 = sshll.u32 [#allocation5], 4
      %s37 = int_to_ptr.vmem [resolvable:$true] %s36
      %42 = dma.hbm_to_vmem [thread:$0]  %s3, 16384, %s37, [#allocation6], 128, 128, 8
    $region17: #{tpu_custom_call.1} parent=1 // pred_fallthru
      _
    // Predicated region
    $region18: #{tpu_custom_call.1} parent=1 // pred_check
      _
    $region19: #{tpu_custom_call.1} parent=1 // pred_check_branch
      %44 = sbr.rel (0) target = $region21
    $region20: #{tpu_custom_call.1} parent=1 // pred_region
      %s46 = ssub.s32 16384, 16384
      %47 = vsyncadd [#allocation6], %s46
      %s48 = sshll.u32 [#allocation7], 4
      %s49 = int_to_ptr.vmem [resolvable:$true] %s48
      %54 = dma.hbm_to_vmem [thread:$0]  %s4, 16384, %s49, [#allocation6], 128, 128, 8
    $region21: #{tpu_custom_call.1} parent=1 // pred_fallthru
      _
    // Predicated region
    $region22: #{tpu_custom_call.1} parent=1 // pred_check
      _
    $region23: #{tpu_custom_call.1} parent=1 // pred_check_branch
      %56 = sbr.rel (0) target = $region25
    $region24: #{tpu_custom_call.1} parent=1 // pred_region
      _
    $region25: #{tpu_custom_call.1} parent=1 // pred_fallthru
      _
    // Predicated region
    $region26: #{tpu_custom_call.1} parent=1 // pred_check
      _
    $region27: #{tpu_custom_call.1} parent=1 // pred_check_branch
      %58 = sbr.rel (0) target = $region29
    $region28: #{tpu_custom_call.1} parent=1 // pred_region
      _
    $region29: #{tpu_custom_call.1} parent=1 // pred_fallthru
      _
    // Predicated region
    $region30: #{tpu_custom_call.1} parent=1 // pred_check
      _
    $region31: #{tpu_custom_call.1} parent=1 // pred_check_branch
      %60 = sbr.rel (0) target = $region33
    $region32: #{tpu_custom_call.1} parent=1 // pred_region
      %61 = dma.done [#allocation3], 16384
    $region33: #{tpu_custom_call.1} parent=1 // pred_fallthru
      _
    // Predicated region
    $region34: #{tpu_custom_call.1} parent=1 // pred_check
      _
    $region35: #{tpu_custom_call.1} parent=1 // pred_check_branch
      %63 = sbr.rel (0) target = $region37
    $region36: #{tpu_custom_call.1} parent=1 // pred_region
      %64 = dma.done [#allocation6], 16384
    $region37: #{tpu_custom_call.1} parent=1 // pred_fallthru
      _
    // Predicated region
    $region38: #{tpu_custom_call.1} parent=1 // pred_check
      _
    $region39: #{tpu_custom_call.1} parent=1 // pred_check_branch
      %66 = sbr.rel (0) target = $region41
    $region40: #{tpu_custom_call.1} parent=1 // pred_region
      %67 = dma.done [#allocation6], 16384
    $region41: #{tpu_custom_call.1} parent=1 // pred_fallthru
      _
    %v68 = vld [vmem:[%s1] sm:$0xff]
    %v69 = vld [vmem:[%s1 + $0x8] sm:$0xff]
    %v70 = vld [vmem:[%s1 + $0x10] sm:$0xff]
    %v71 = vld [vmem:[%s1 + $0x18] sm:$0xff]
    %v72 = vld [vmem:[%s1 + $0x20] sm:$0xff]
    %v73 = vld [vmem:[%s1 + $0x28] sm:$0xff]
    %v74 = vld [vmem:[%s1 + $0x30] sm:$0xff]
    %v75 = vld [vmem:[%s1 + $0x38] sm:$0xff]
    %v76 = vld [vmem:[%s1 + $0x40] sm:$0xff]
    %v77 = vld [vmem:[%s1 + $0x48] sm:$0xff]
    %v78 = vld [vmem:[%s1 + $0x50] sm:$0xff]
    %v79 = vld [vmem:[%s1 + $0x58] sm:$0xff]
    %v80 = vld [vmem:[%s1 + $0x60] sm:$0xff]
    %v81 = vld [vmem:[%s1 + $0x68] sm:$0xff]
    %v82 = vld [vmem:[%s1 + $0x70] sm:$0xff]
    %v83 = vld [vmem:[%s1 + $0x78] sm:$0xff]
    %v84 = vld [vmem:[%s0] sm:$0x1]
    %86 = vset.pattern.permute.xlu0 0
    %87 = vperm.xlu0 %86, %v68
    %v88 = vpop.permute.xlu0 %87
    %91 = vset.pattern.permute.xlu0 0
    %92 = vperm.xlu0 %91, %v69
    %v93 = vpop.permute.xlu0 %92
    %96 = vset.pattern.permute.xlu0 0
    %97 = vperm.xlu0 %96, %v70
    %v98 = vpop.permute.xlu0 %97
    %101 = vset.pattern.permute.xlu0 0
    %102 = vperm.xlu0 %101, %v71
    %v103 = vpop.permute.xlu0 %102
    %106 = vset.pattern.permute.xlu0 0
    %107 = vperm.xlu0 %106, %v72
    %v108 = vpop.permute.xlu0 %107
    %111 = vset.pattern.permute.xlu0 0
    %112 = vperm.xlu0 %111, %v73
    %v113 = vpop.permute.xlu0 %112
    %116 = vset.pattern.permute.xlu0 0
    %117 = vperm.xlu0 %116, %v74
    %v118 = vpop.permute.xlu0 %117
    %121 = vset.pattern.permute.xlu0 0
    %122 = vperm.xlu0 %121, %v75
    %v123 = vpop.permute.xlu0 %122
    %126 = vset.pattern.permute.xlu0 0
    %127 = vperm.xlu0 %126, %v76
    %v128 = vpop.permute.xlu0 %127
    %131 = vset.pattern.permute.xlu0 0
    %132 = vperm.xlu0 %131, %v77
    %v133 = vpop.permute.xlu0 %132
    %136 = vset.pattern.permute.xlu0 0
    %137 = vperm.xlu0 %136, %v78
    %v138 = vpop.permute.xlu0 %137
    %141 = vset.pattern.permute.xlu0 0
    %142 = vperm.xlu0 %141, %v79
    %v143 = vpop.permute.xlu0 %142
    %146 = vset.pattern.permute.xlu0 0
    %147 = vperm.xlu0 %146, %v80
    %v148 = vpop.permute.xlu0 %147
    %151 = vset.pattern.permute.xlu0 0
    %152 = vperm.xlu0 %151, %v81
    %v153 = vpop.permute.xlu0 %152
    %156 = vset.pattern.permute.xlu0 0
    %157 = vperm.xlu0 %156, %v82
    %v158 = vpop.permute.xlu0 %157
    %161 = vset.pattern.permute.xlu0 0
    %162 = vperm.xlu0 %161, %v83
    %v163 = vpop.permute.xlu0 %162
    %v166 = vlaneseq
    %v167 = vshrl.u32 %v166, 7
    %v168 = vsub.s32 0, %v167
    %v169 = vrot.slane %v84, %v168
    %v171 = vmul.f32 %v88, %v169
    %v172 = vmul.f32 %v93, %v169
    %v173 = vmul.f32 %v98, %v169
    %v174 = vmul.f32 %v103, %v169
    %v175 = vmul.f32 %v108, %v169
    %v176 = vmul.f32 %v113, %v169
    %v177 = vmul.f32 %v118, %v169
    %v178 = vmul.f32 %v123, %v169
    %v179 = vmul.f32 %v128, %v169
    %v180 = vmul.f32 %v133, %v169
    %v181 = vmul.f32 %v138, %v169
    %v182 = vmul.f32 %v143, %v169
    %v183 = vmul.f32 %v148, %v169
    %v184 = vmul.f32 %v153, %v169
    %v185 = vmul.f32 %v158, %v169
    %v186 = vmul.f32 %v163, %v169
    %v187 = vld [vmem:[%s5] sm:$0xff]
    %v188 = vld [vmem:[%s5 + $0x8] sm:$0xff]
    %v189 = vld [vmem:[%s5 + $0x10] sm:$0xff]
    %v190 = vld [vmem:[%s5 + $0x18] sm:$0xff]
    %v191 = vld [vmem:[%s5 + $0x20] sm:$0xff]
    %v192 = vld [vmem:[%s5 + $0x28] sm:$0xff]
    %v193 = vld [vmem:[%s5 + $0x30] sm:$0xff]
    %v194 = vld [vmem:[%s5 + $0x38] sm:$0xff]
    %v195 = vld [vmem:[%s5 + $0x40] sm:$0xff]
    %v196 = vld [vmem:[%s5 + $0x48] sm:$0xff]
    %v197 = vld [vmem:[%s5 + $0x50] sm:$0xff]
    %v198 = vld [vmem:[%s5 + $0x58] sm:$0xff]
    %v199 = vld [vmem:[%s5 + $0x60] sm:$0xff]
    %v200 = vld [vmem:[%s5 + $0x68] sm:$0xff]
    %v201 = vld [vmem:[%s5 + $0x70] sm:$0xff]
    %v202 = vld [vmem:[%s5 + $0x78] sm:$0xff]
    %v203 = vld [vmem:[#allocation2] sm:$0xff]
    %v204 = vld [vmem:[#allocation2 + $0x8] sm:$0xff]
    %v205 = vld [vmem:[#allocation2 + $0x10] sm:$0xff]
    %v206 = vld [vmem:[#allocation2 + $0x18] sm:$0xff]
    %v207 = vld [vmem:[#allocation2 + $0x20] sm:$0xff]
    %v208 = vld [vmem:[#allocation2 + $0x28] sm:$0xff]
    %v209 = vld [vmem:[#allocation2 + $0x30] sm:$0xff]
    %v210 = vld [vmem:[#allocation2 + $0x38] sm:$0xff]
    %v211 = vld [vmem:[#allocation2 + $0x40] sm:$0xff]
    %v212 = vld [vmem:[#allocation2 + $0x48] sm:$0xff]
    %v213 = vld [vmem:[#allocation2 + $0x50] sm:$0xff]
    %v214 = vld [vmem:[#allocation2 + $0x58] sm:$0xff]
    %v215 = vld [vmem:[#allocation2 + $0x60] sm:$0xff]
    %v216 = vld [vmem:[#allocation2 + $0x68] sm:$0xff]
    %v217 = vld [vmem:[#allocation2 + $0x70] sm:$0xff]
    %v218 = vld [vmem:[#allocation2 + $0x78] sm:$0xff]
    %v219 = vmul.f32 %v171, %v203
    %v220 = vmul.f32 %v172, %v204
    %v221 = vmul.f32 %v173, %v205
    %v222 = vmul.f32 %v174, %v206
    %v223 = vmul.f32 %v175, %v207
    %v224 = vmul.f32 %v176, %v208
    %v225 = vmul.f32 %v177, %v209
    %v226 = vmul.f32 %v178, %v210
    %v227 = vmul.f32 %v179, %v211
    %v228 = vmul.f32 %v180, %v212
    %v229 = vmul.f32 %v181, %v213
    %v230 = vmul.f32 %v182, %v214
    %v231 = vmul.f32 %v183, %v215
    %v232 = vmul.f32 %v184, %v216
    %v233 = vmul.f32 %v185, %v217
    %v234 = vmul.f32 %v186, %v218
    %v235 = vld [vmem:[#allocation5] sm:$0xff]
    %v236 = vld [vmem:[#allocation5 + $0x8] sm:$0xff]
    %v237 = vld [vmem:[#allocation5 + $0x10] sm:$0xff]
    %v238 = vld [vmem:[#allocation5 + $0x18] sm:$0xff]
    %v239 = vld [vmem:[#allocation5 + $0x20] sm:$0xff]
    %v240 = vld [vmem:[#allocation5 + $0x28] sm:$0xff]
    %v241 = vld [vmem:[#allocation5 + $0x30] sm:$0xff]
    %v242 = vld [vmem:[#allocation5 + $0x38] sm:$0xff]
    %v243 = vld [vmem:[#allocation5 + $0x40] sm:$0xff]
    %v244 = vld [vmem:[#allocation5 + $0x48] sm:$0xff]
    %v245 = vld [vmem:[#allocation5 + $0x50] sm:$0xff]
    %v246 = vld [vmem:[#allocation5 + $0x58] sm:$0xff]
    %v247 = vld [vmem:[#allocation5 + $0x60] sm:$0xff]
    %v248 = vld [vmem:[#allocation5 + $0x68] sm:$0xff]
    %v249 = vld [vmem:[#allocation5 + $0x70] sm:$0xff]
    %v250 = vld [vmem:[#allocation5 + $0x78] sm:$0xff]
    %v251 = vadd.f32 %v219, %v235
    %v252 = vadd.f32 %v220, %v236
    %v253 = vadd.f32 %v221, %v237
    %v254 = vadd.f32 %v222, %v238
    %v255 = vadd.f32 %v223, %v239
    %v256 = vadd.f32 %v224, %v240
    %v257 = vadd.f32 %v225, %v241
    %v258 = vadd.f32 %v226, %v242
    %v259 = vadd.f32 %v227, %v243
    %v260 = vadd.f32 %v228, %v244
    %v261 = vadd.f32 %v229, %v245
    %v262 = vadd.f32 %v230, %v246
    %v263 = vadd.f32 %v231, %v247
    %v264 = vadd.f32 %v232, %v248
    %v265 = vadd.f32 %v233, %v249
    %v266 = vadd.f32 %v234, %v250
    %v267 = vld [vmem:[#allocation7] sm:$0xff]
    %v268 = vld [vmem:[#allocation7 + $0x8] sm:$0xff]
    %v269 = vld [vmem:[#allocation7 + $0x10] sm:$0xff]
    %v270 = vld [vmem:[#allocation7 + $0x18] sm:$0xff]
    %v271 = vld [vmem:[#allocation7 + $0x20] sm:$0xff]
    %v272 = vld [vmem:[#allocation7 + $0x28] sm:$0xff]
    %v273 = vld [vmem:[#allocation7 + $0x30] sm:$0xff]
    %v274 = vld [vmem:[#allocation7 + $0x38] sm:$0xff]
    %v275 = vld [vmem:[#allocation7 + $0x40] sm:$0xff]
    %v276 = vld [vmem:[#allocation7 + $0x48] sm:$0xff]
    %v277 = vld [vmem:[#allocation7 + $0x50] sm:$0xff]
    %v278 = vld [vmem:[#allocation7 + $0x58] sm:$0xff]
    %v279 = vld [vmem:[#allocation7 + $0x60] sm:$0xff]
    %v280 = vld [vmem:[#allocation7 + $0x68] sm:$0xff]
    %v281 = vld [vmem:[#allocation7 + $0x70] sm:$0xff]
    %v282 = vld [vmem:[#allocation7 + $0x78] sm:$0xff]
    %v283 = vmul.f32 %v267, %v251
    %v284 = vmul.f32 %v268, %v252
    %v285 = vmul.f32 %v269, %v253
    %v286 = vmul.f32 %v270, %v254
    %v287 = vmul.f32 %v271, %v255
    %v288 = vmul.f32 %v272, %v256
    %v289 = vmul.f32 %v273, %v257
    %v290 = vmul.f32 %v274, %v258
    %v291 = vmul.f32 %v275, %v259
    %v292 = vmul.f32 %v276, %v260
    %v293 = vmul.f32 %v277, %v261
    %v294 = vmul.f32 %v278, %v262
    %v295 = vmul.f32 %v279, %v263
    %v296 = vmul.f32 %v280, %v264
    %v297 = vmul.f32 %v281, %v265
    %v298 = vmul.f32 %v282, %v266
    %v299 = vadd.f32 %v187, %v283
    %v300 = vadd.f32 %v188, %v284
    %v301 = vadd.f32 %v189, %v285
    %v302 = vadd.f32 %v190, %v286
    %v303 = vadd.f32 %v191, %v287
    %v304 = vadd.f32 %v192, %v288
    %v305 = vadd.f32 %v193, %v289
    %v306 = vadd.f32 %v194, %v290
    %v307 = vadd.f32 %v195, %v291
    %v308 = vadd.f32 %v196, %v292
    %v309 = vadd.f32 %v197, %v293
    %v310 = vadd.f32 %v198, %v294
    %v311 = vadd.f32 %v199, %v295
    %v312 = vadd.f32 %v200, %v296
    %v313 = vadd.f32 %v201, %v297
    %v314 = vadd.f32 %v202, %v298
    %s315 = scalar_lea.vmem [#allocation2], 128
    %v316 = vld [vmem:[%s315] sm:$0xff]
    %v317 = vld [vmem:[%s315 + $0x8] sm:$0xff]
    %v318 = vld [vmem:[%s315 + $0x10] sm:$0xff]
    %v319 = vld [vmem:[%s315 + $0x18] sm:$0xff]
    %v320 = vld [vmem:[%s315 + $0x20] sm:$0xff]
    %v321 = vld [vmem:[%s315 + $0x28] sm:$0xff]
    %v322 = vld [vmem:[%s315 + $0x30] sm:$0xff]
    %v323 = vld [vmem:[%s315 + $0x38] sm:$0xff]
    %v324 = vld [vmem:[%s315 + $0x40] sm:$0xff]
    %v325 = vld [vmem:[%s315 + $0x48] sm:$0xff]
    %v326 = vld [vmem:[%s315 + $0x50] sm:$0xff]
    %v327 = vld [vmem:[%s315 + $0x58] sm:$0xff]
    %v328 = vld [vmem:[%s315 + $0x60] sm:$0xff]
    %v329 = vld [vmem:[%s315 + $0x68] sm:$0xff]
    %v330 = vld [vmem:[%s315 + $0x70] sm:$0xff]
    %v331 = vld [vmem:[%s315 + $0x78] sm:$0xff]
    %v332 = vmul.f32 %v171, %v316
    %v333 = vmul.f32 %v172, %v317
    %v334 = vmul.f32 %v173, %v318
    %v335 = vmul.f32 %v174, %v319
    %v336 = vmul.f32 %v175, %v320
    %v337 = vmul.f32 %v176, %v321
    %v338 = vmul.f32 %v177, %v322
    %v339 = vmul.f32 %v178, %v323
    %v340 = vmul.f32 %v179, %v324
    %v341 = vmul.f32 %v180, %v325
    %v342 = vmul.f32 %v181, %v326
    %v343 = vmul.f32 %v182, %v327
    %v344 = vmul.f32 %v183, %v328
    %v345 = vmul.f32 %v184, %v329
    %v346 = vmul.f32 %v185, %v330
    %v347 = vmul.f32 %v186, %v331
    %s348 = scalar_lea.vmem [#allocation5], 128
    %v349 = vld [vmem:[%s348] sm:$0xff]
    %v350 = vld [vmem:[%s348 + $0x8] sm:$0xff]
    %v351 = vld [vmem:[%s348 + $0x10] sm:$0xff]
    %v352 = vld [vmem:[%s348 + $0x18] sm:$0xff]
    %v353 = vld [vmem:[%s348 + $0x20] sm:$0xff]
    %v354 = vld [vmem:[%s348 + $0x28] sm:$0xff]
    %v355 = vld [vmem:[%s348 + $0x30] sm:$0xff]
    %v356 = vld [vmem:[%s348 + $0x38] sm:$0xff]
    %v357 = vld [vmem:[%s348 + $0x40] sm:$0xff]
    %v358 = vld [vmem:[%s348 + $0x48] sm:$0xff]
    %v359 = vld [vmem:[%s348 + $0x50] sm:$0xff]
    %v360 = vld [vmem:[%s348 + $0x58] sm:$0xff]
    %v361 = vld [vmem:[%s348 + $0x60] sm:$0xff]
    %v362 = vld [vmem:[%s348 + $0x68] sm:$0xff]
    %v363 = vld [vmem:[%s348 + $0x70] sm:$0xff]
    %v364 = vld [vmem:[%s348 + $0x78] sm:$0xff]
    %v365 = vadd.f32 %v332, %v349
    %v366 = vadd.f32 %v333, %v350
    %v367 = vadd.f32 %v334, %v351
    %v368 = vadd.f32 %v335, %v352
    %v369 = vadd.f32 %v336, %v353
    %v370 = vadd.f32 %v337, %v354
    %v371 = vadd.f32 %v338, %v355
    %v372 = vadd.f32 %v339, %v356
    %v373 = vadd.f32 %v340, %v357
    %v374 = vadd.f32 %v341, %v358
    %v375 = vadd.f32 %v342, %v359
    %v376 = vadd.f32 %v343, %v360
    %v377 = vadd.f32 %v344, %v361
    %v378 = vadd.f32 %v345, %v362
    %v379 = vadd.f32 %v346, %v363
    %v380 = vadd.f32 %v347, %v364
    %s381 = scalar_lea.vmem [#allocation7], 128
    %v382 = vld [vmem:[%s381] sm:$0xff]
    %v383 = vld [vmem:[%s381 + $0x8] sm:$0xff]
    %v384 = vld [vmem:[%s381 + $0x10] sm:$0xff]
    %v385 = vld [vmem:[%s381 + $0x18] sm:$0xff]
    %v386 = vld [vmem:[%s381 + $0x20] sm:$0xff]
    %v387 = vld [vmem:[%s381 + $0x28] sm:$0xff]
    %v388 = vld [vmem:[%s381 + $0x30] sm:$0xff]
    %v389 = vld [vmem:[%s381 + $0x38] sm:$0xff]
    %v390 = vld [vmem:[%s381 + $0x40] sm:$0xff]
    %v391 = vld [vmem:[%s381 + $0x48] sm:$0xff]
    %v392 = vld [vmem:[%s381 + $0x50] sm:$0xff]
    %v393 = vld [vmem:[%s381 + $0x58] sm:$0xff]
    %v394 = vld [vmem:[%s381 + $0x60] sm:$0xff]
    %v395 = vld [vmem:[%s381 + $0x68] sm:$0xff]
    %v396 = vld [vmem:[%s381 + $0x70] sm:$0xff]
    %v397 = vld [vmem:[%s381 + $0x78] sm:$0xff]
    %v398 = vmul.f32 %v382, %v365
    %v399 = vmul.f32 %v383, %v366
    %v400 = vmul.f32 %v384, %v367
    %v401 = vmul.f32 %v385, %v368
    %v402 = vmul.f32 %v386, %v369
    %v403 = vmul.f32 %v387, %v370
    %v404 = vmul.f32 %v388, %v371
    %v405 = vmul.f32 %v389, %v372
    %v406 = vmul.f32 %v390, %v373
    %v407 = vmul.f32 %v391, %v374
    %v408 = vmul.f32 %v392, %v375
    %v409 = vmul.f32 %v393, %v376
    %v410 = vmul.f32 %v394, %v377
    %v411 = vmul.f32 %v395, %v378
    %v412 = vmul.f32 %v396, %v379
    %v413 = vmul.f32 %v397, %v380
    %v414 = vadd.f32 %v299, %v398
    %v415 = vadd.f32 %v300, %v399
    %v416 = vadd.f32 %v301, %v400
    %v417 = vadd.f32 %v302, %v401
    %v418 = vadd.f32 %v303, %v402
    %v419 = vadd.f32 %v304, %v403
    %v420 = vadd.f32 %v305, %v404
    %v421 = vadd.f32 %v306, %v405
    %v422 = vadd.f32 %v307, %v406
    %v423 = vadd.f32 %v308, %v407
    %v424 = vadd.f32 %v309, %v408
    %v425 = vadd.f32 %v310, %v409
    %v426 = vadd.f32 %v311, %v410
    %v427 = vadd.f32 %v312, %v411
    %v428 = vadd.f32 %v313, %v412
    %v429 = vadd.f32 %v314, %v413
    %s430 = scalar_lea.vmem [#allocation2], 256
    %v431 = vld [vmem:[%s430] sm:$0xff]
    %v432 = vld [vmem:[%s430 + $0x8] sm:$0xff]
    %v433 = vld [vmem:[%s430 + $0x10] sm:$0xff]
    %v434 = vld [vmem:[%s430 + $0x18] sm:$0xff]
    %v435 = vld [vmem:[%s430 + $0x20] sm:$0xff]
    %v436 = vld [vmem:[%s430 + $0x28] sm:$0xff]
    %v437 = vld [vmem:[%s430 + $0x30] sm:$0xff]
    %v438 = vld [vmem:[%s430 + $0x38] sm:$0xff]
    %v439 = vld [vmem:[%s430 + $0x40] sm:$0xff]
    %v440 = vld [vmem:[%s430 + $0x48] sm:$0xff]
    %v441 = vld [vmem:[%s430 + $0x50] sm:$0xff]
    %v442 = vld [vmem:[%s430 + $0x58] sm:$0xff]
    %v443 = vld [vmem:[%s430 + $0x60] sm:$0xff]
    %v444 = vld [vmem:[%s430 + $0x68] sm:$0xff]
    %v445 = vld [vmem:[%s430 + $0x70] sm:$0xff]
    %v446 = vld [vmem:[%s430 + $0x78] sm:$0xff]
    %v447 = vmul.f32 %v171, %v431
    %v448 = vmul.f32 %v172, %v432
    %v449 = vmul.f32 %v173, %v433
    %v450 = vmul.f32 %v174, %v434
    %v451 = vmul.f32 %v175, %v435
    %v452 = vmul.f32 %v176, %v436
    %v453 = vmul.f32 %v177, %v437
    %v454 = vmul.f32 %v178, %v438
    %v455 = vmul.f32 %v179, %v439
    %v456 = vmul.f32 %v180, %v440
    %v457 = vmul.f32 %v181, %v441
    %v458 = vmul.f32 %v182, %v442
    %v459 = vmul.f32 %v183, %v443
    %v460 = vmul.f32 %v184, %v444
    %v461 = vmul.f32 %v185, %v445
    %v462 = vmul.f32 %v186, %v446
    %s463 = scalar_lea.vmem [#allocation5], 256
    %v464 = vld [vmem:[%s463] sm:$0xff]
    %v465 = vld [vmem:[%s463 + $0x8] sm:$0xff]
    %v466 = vld [vmem:[%s463 + $0x10] sm:$0xff]
    %v467 = vld [vmem:[%s463 + $0x18] sm:$0xff]
    %v468 = vld [vmem:[%s463 + $0x20] sm:$0xff]
    %v469 = vld [vmem:[%s463 + $0x28] sm:$0xff]
    %v470 = vld [vmem:[%s463 + $0x30] sm:$0xff]
    %v471 = vld [vmem:[%s463 + $0x38] sm:$0xff]
    %v472 = vld [vmem:[%s463 + $0x40] sm:$0xff]
    %v473 = vld [vmem:[%s463 + $0x48] sm:$0xff]
    %v474 = vld [vmem:[%s463 + $0x50] sm:$0xff]
    %v475 = vld [vmem:[%s463 + $0x58] sm:$0xff]
    %v476 = vld [vmem:[%s463 + $0x60] sm:$0xff]
    %v477 = vld [vmem:[%s463 + $0x68] sm:$0xff]
    %v478 = vld [vmem:[%s463 + $0x70] sm:$0xff]
    %v479 = vld [vmem:[%s463 + $0x78] sm:$0xff]
    %v480 = vadd.f32 %v447, %v464
    %v481 = vadd.f32 %v448, %v465
    %v482 = vadd.f32 %v449, %v466
    %v483 = vadd.f32 %v450, %v467
    %v484 = vadd.f32 %v451, %v468
    %v485 = vadd.f32 %v452, %v469
    %v486 = vadd.f32 %v453, %v470
    %v487 = vadd.f32 %v454, %v471
    %v488 = vadd.f32 %v455, %v472
    %v489 = vadd.f32 %v456, %v473
    %v490 = vadd.f32 %v457, %v474
    %v491 = vadd.f32 %v458, %v475
    %v492 = vadd.f32 %v459, %v476
    %v493 = vadd.f32 %v460, %v477
    %v494 = vadd.f32 %v461, %v478
    %v495 = vadd.f32 %v462, %v479
    %s496 = scalar_lea.vmem [#allocation7], 256
    %v497 = vld [vmem:[%s496] sm:$0xff]
    %v498 = vld [vmem:[%s496 + $0x8] sm:$0xff]
    %v499 = vld [vmem:[%s496 + $0x10] sm:$0xff]
    %v500 = vld [vmem:[%s496 + $0x18] sm:$0xff]
    %v501 = vld [vmem:[%s496 + $0x20] sm:$0xff]
    %v502 = vld [vmem:[%s496 + $0x28] sm:$0xff]
    %v503 = vld [vmem:[%s496 + $0x30] sm:$0xff]
    %v504 = vld [vmem:[%s496 + $0x38] sm:$0xff]
    %v505 = vld [vmem:[%s496 + $0x40] sm:$0xff]
    %v506 = vld [vmem:[%s496 + $0x48] sm:$0xff]
    %v507 = vld [vmem:[%s496 + $0x50] sm:$0xff]
    %v508 = vld [vmem:[%s496 + $0x58] sm:$0xff]
    %v509 = vld [vmem:[%s496 + $0x60] sm:$0xff]
    %v510 = vld [vmem:[%s496 + $0x68] sm:$0xff]
    %v511 = vld [vmem:[%s496 + $0x70] sm:$0xff]
    %v512 = vld [vmem:[%s496 + $0x78] sm:$0xff]
    %v513 = vmul.f32 %v497, %v480
    %v514 = vmul.f32 %v498, %v481
    %v515 = vmul.f32 %v499, %v482
    %v516 = vmul.f32 %v500, %v483
    %v517 = vmul.f32 %v501, %v484
    %v518 = vmul.f32 %v502, %v485
    %v519 = vmul.f32 %v503, %v486
    %v520 = vmul.f32 %v504, %v487
    %v521 = vmul.f32 %v505, %v488
    %v522 = vmul.f32 %v506, %v489
    %v523 = vmul.f32 %v507, %v490
    %v524 = vmul.f32 %v508, %v491
    %v525 = vmul.f32 %v509, %v492
    %v526 = vmul.f32 %v510, %v493
    %v527 = vmul.f32 %v511, %v494
    %v528 = vmul.f32 %v512, %v495
    %v529 = vadd.f32 %v414, %v513
    %v530 = vadd.f32 %v415, %v514
    %v531 = vadd.f32 %v416, %v515
    %v532 = vadd.f32 %v417, %v516
    %v533 = vadd.f32 %v418, %v517
    %v534 = vadd.f32 %v419, %v518
    %v535 = vadd.f32 %v420, %v519
    %v536 = vadd.f32 %v421, %v520
    %v537 = vadd.f32 %v422, %v521
    %v538 = vadd.f32 %v423, %v522
    %v539 = vadd.f32 %v424, %v523
    %v540 = vadd.f32 %v425, %v524
    %v541 = vadd.f32 %v426, %v525
    %v542 = vadd.f32 %v427, %v526
    %v543 = vadd.f32 %v428, %v527
    %v544 = vadd.f32 %v429, %v528
    %s545 = scalar_lea.vmem [#allocation2], 384
    %v546 = vld [vmem:[%s545] sm:$0xff]
    %v547 = vld [vmem:[%s545 + $0x8] sm:$0xff]
    %v548 = vld [vmem:[%s545 + $0x10] sm:$0xff]
    %v549 = vld [vmem:[%s545 + $0x18] sm:$0xff]
    %v550 = vld [vmem:[%s545 + $0x20] sm:$0xff]
    %v551 = vld [vmem:[%s545 + $0x28] sm:$0xff]
    %v552 = vld [vmem:[%s545 + $0x30] sm:$0xff]
    %v553 = vld [vmem:[%s545 + $0x38] sm:$0xff]
    %v554 = vld [vmem:[%s545 + $0x40] sm:$0xff]
    %v555 = vld [vmem:[%s545 + $0x48] sm:$0xff]
    %v556 = vld [vmem:[%s545 + $0x50] sm:$0xff]
    %v557 = vld [vmem:[%s545 + $0x58] sm:$0xff]
    %v558 = vld [vmem:[%s545 + $0x60] sm:$0xff]
    %v559 = vld [vmem:[%s545 + $0x68] sm:$0xff]
    %v560 = vld [vmem:[%s545 + $0x70] sm:$0xff]
    %v561 = vld [vmem:[%s545 + $0x78] sm:$0xff]
    %v562 = vmul.f32 %v171, %v546
    %v563 = vmul.f32 %v172, %v547
    %v564 = vmul.f32 %v173, %v548
    %v565 = vmul.f32 %v174, %v549
    %v566 = vmul.f32 %v175, %v550
    %v567 = vmul.f32 %v176, %v551
    %v568 = vmul.f32 %v177, %v552
    %v569 = vmul.f32 %v178, %v553
    %v570 = vmul.f32 %v179, %v554
    %v571 = vmul.f32 %v180, %v555
    %v572 = vmul.f32 %v181, %v556
    %v573 = vmul.f32 %v182, %v557
    %v574 = vmul.f32 %v183, %v558
    %v575 = vmul.f32 %v184, %v559
    %v576 = vmul.f32 %v185, %v560
    %v577 = vmul.f32 %v186, %v561
    %s578 = scalar_lea.vmem [#allocation5], 384
    %v579 = vld [vmem:[%s578] sm:$0xff]
    %v580 = vld [vmem:[%s578 + $0x8] sm:$0xff]
    %v581 = vld [vmem:[%s578 + $0x10] sm:$0xff]
    %v582 = vld [vmem:[%s578 + $0x18] sm:$0xff]
    %v583 = vld [vmem:[%s578 + $0x20] sm:$0xff]
    %v584 = vld [vmem:[%s578 + $0x28] sm:$0xff]
    %v585 = vld [vmem:[%s578 + $0x30] sm:$0xff]
    %v586 = vld [vmem:[%s578 + $0x38] sm:$0xff]
    %v587 = vld [vmem:[%s578 + $0x40] sm:$0xff]
    %v588 = vld [vmem:[%s578 + $0x48] sm:$0xff]
    %v589 = vld [vmem:[%s578 + $0x50] sm:$0xff]
    %v590 = vld [vmem:[%s578 + $0x58] sm:$0xff]
    %v591 = vld [vmem:[%s578 + $0x60] sm:$0xff]
    %v592 = vld [vmem:[%s578 + $0x68] sm:$0xff]
    %v593 = vld [vmem:[%s578 + $0x70] sm:$0xff]
    %v594 = vld [vmem:[%s578 + $0x78] sm:$0xff]
    %v595 = vadd.f32 %v562, %v579
    %v596 = vadd.f32 %v563, %v580
    %v597 = vadd.f32 %v564, %v581
    %v598 = vadd.f32 %v565, %v582
    %v599 = vadd.f32 %v566, %v583
    %v600 = vadd.f32 %v567, %v584
    %v601 = vadd.f32 %v568, %v585
    %v602 = vadd.f32 %v569, %v586
    %v603 = vadd.f32 %v570, %v587
    %v604 = vadd.f32 %v571, %v588
    %v605 = vadd.f32 %v572, %v589
    %v606 = vadd.f32 %v573, %v590
    %v607 = vadd.f32 %v574, %v591
    %v608 = vadd.f32 %v575, %v592
    %v609 = vadd.f32 %v576, %v593
    %v610 = vadd.f32 %v577, %v594
    %s611 = scalar_lea.vmem [#allocation7], 384
    %v612 = vld [vmem:[%s611] sm:$0xff]
    %v613 = vld [vmem:[%s611 + $0x8] sm:$0xff]
    %v614 = vld [vmem:[%s611 + $0x10] sm:$0xff]
    %v615 = vld [vmem:[%s611 + $0x18] sm:$0xff]
    %v616 = vld [vmem:[%s611 + $0x20] sm:$0xff]
    %v617 = vld [vmem:[%s611 + $0x28] sm:$0xff]
    %v618 = vld [vmem:[%s611 + $0x30] sm:$0xff]
    %v619 = vld [vmem:[%s611 + $0x38] sm:$0xff]
    %v620 = vld [vmem:[%s611 + $0x40] sm:$0xff]
    %v621 = vld [vmem:[%s611 + $0x48] sm:$0xff]
    %v622 = vld [vmem:[%s611 + $0x50] sm:$0xff]
    %v623 = vld [vmem:[%s611 + $0x58] sm:$0xff]
    %v624 = vld [vmem:[%s611 + $0x60] sm:$0xff]
    %v625 = vld [vmem:[%s611 + $0x68] sm:$0xff]
    %v626 = vld [vmem:[%s611 + $0x70] sm:$0xff]
    %v627 = vld [vmem:[%s611 + $0x78] sm:$0xff]
    %v628 = vmul.f32 %v612, %v595
    %v629 = vmul.f32 %v613, %v596
    %v630 = vmul.f32 %v614, %v597
    %v631 = vmul.f32 %v615, %v598
    %v632 = vmul.f32 %v616, %v599
    %v633 = vmul.f32 %v617, %v600
    %v634 = vmul.f32 %v618, %v601
    %v635 = vmul.f32 %v619, %v602
    %v636 = vmul.f32 %v620, %v603
    %v637 = vmul.f32 %v621, %v604
    %v638 = vmul.f32 %v622, %v605
    %v639 = vmul.f32 %v623, %v606
    %v640 = vmul.f32 %v624, %v607
    %v641 = vmul.f32 %v625, %v608
    %v642 = vmul.f32 %v626, %v609
    %v643 = vmul.f32 %v627, %v610
    %v644 = vadd.f32 %v529, %v628
    %v645 = vadd.f32 %v530, %v629
    %v646 = vadd.f32 %v531, %v630
    %v647 = vadd.f32 %v532, %v631
    %v648 = vadd.f32 %v533, %v632
    %v649 = vadd.f32 %v534, %v633
    %v650 = vadd.f32 %v535, %v634
    %v651 = vadd.f32 %v536, %v635
    %v652 = vadd.f32 %v537, %v636
    %v653 = vadd.f32 %v538, %v637
    %v654 = vadd.f32 %v539, %v638
    %v655 = vadd.f32 %v540, %v639
    %v656 = vadd.f32 %v541, %v640
    %v657 = vadd.f32 %v542, %v641
    %v658 = vadd.f32 %v543, %v642
    %v659 = vadd.f32 %v544, %v643
    %s660 = scalar_lea.vmem [#allocation2], 512
    %v661 = vld [vmem:[%s660] sm:$0xff]
    %v662 = vld [vmem:[%s660 + $0x8] sm:$0xff]
    %v663 = vld [vmem:[%s660 + $0x10] sm:$0xff]
    %v664 = vld [vmem:[%s660 + $0x18] sm:$0xff]
    %v665 = vld [vmem:[%s660 + $0x20] sm:$0xff]
    %v666 = vld [vmem:[%s660 + $0x28] sm:$0xff]
    %v667 = vld [vmem:[%s660 + $0x30] sm:$0xff]
    %v668 = vld [vmem:[%s660 + $0x38] sm:$0xff]
    %v669 = vld [vmem:[%s660 + $0x40] sm:$0xff]
    %v670 = vld [vmem:[%s660 + $0x48] sm:$0xff]
    %v671 = vld [vmem:[%s660 + $0x50] sm:$0xff]
    %v672 = vld [vmem:[%s660 + $0x58] sm:$0xff]
    %v673 = vld [vmem:[%s660 + $0x60] sm:$0xff]
    %v674 = vld [vmem:[%s660 + $0x68] sm:$0xff]
    %v675 = vld [vmem:[%s660 + $0x70] sm:$0xff]
    %v676 = vld [vmem:[%s660 + $0x78] sm:$0xff]
    %v677 = vmul.f32 %v171, %v661
    %v678 = vmul.f32 %v172, %v662
    %v679 = vmul.f32 %v173, %v663
    %v680 = vmul.f32 %v174, %v664
    %v681 = vmul.f32 %v175, %v665
    %v682 = vmul.f32 %v176, %v666
    %v683 = vmul.f32 %v177, %v667
    %v684 = vmul.f32 %v178, %v668
    %v685 = vmul.f32 %v179, %v669
    %v686 = vmul.f32 %v180, %v670
    %v687 = vmul.f32 %v181, %v671
    %v688 = vmul.f32 %v182, %v672
    %v689 = vmul.f32 %v183, %v673
    %v690 = vmul.f32 %v184, %v674
    %v691 = vmul.f32 %v185, %v675
    %v692 = vmul.f32 %v186, %v676
    %s693 = scalar_lea.vmem [#allocation5], 512
    %v694 = vld [vmem:[%s693] sm:$0xff]
    %v695 = vld [vmem:[%s693 + $0x8] sm:$0xff]
    %v696 = vld [vmem:[%s693 + $0x10] sm:$0xff]
    %v697 = vld [vmem:[%s693 + $0x18] sm:$0xff]
    %v698 = vld [vmem:[%s693 + $0x20] sm:$0xff]
    %v699 = vld [vmem:[%s693 + $0x28] sm:$0xff]
    %v700 = vld [vmem:[%s693 + $0x30] sm:$0xff]
    %v701 = vld [vmem:[%s693 + $0x38] sm:$0xff]
    %v702 = vld [vmem:[%s693 + $0x40] sm:$0xff]
    %v703 = vld [vmem:[%s693 + $0x48] sm:$0xff]
    %v704 = vld [vmem:[%s693 + $0x50] sm:$0xff]
    %v705 = vld [vmem:[%s693 + $0x58] sm:$0xff]
    %v706 = vld [vmem:[%s693 + $0x60] sm:$0xff]
    %v707 = vld [vmem:[%s693 + $0x68] sm:$0xff]
    %v708 = vld [vmem:[%s693 + $0x70] sm:$0xff]
    %v709 = vld [vmem:[%s693 + $0x78] sm:$0xff]
    %v710 = vadd.f32 %v677, %v694
    %v711 = vadd.f32 %v678, %v695
    %v712 = vadd.f32 %v679, %v696
    %v713 = vadd.f32 %v680, %v697
    %v714 = vadd.f32 %v681, %v698
    %v715 = vadd.f32 %v682, %v699
    %v716 = vadd.f32 %v683, %v700
    %v717 = vadd.f32 %v684, %v701
    %v718 = vadd.f32 %v685, %v702
    %v719 = vadd.f32 %v686, %v703
    %v720 = vadd.f32 %v687, %v704
    %v721 = vadd.f32 %v688, %v705
    %v722 = vadd.f32 %v689, %v706
    %v723 = vadd.f32 %v690, %v707
    %v724 = vadd.f32 %v691, %v708
    %v725 = vadd.f32 %v692, %v709
    %s726 = scalar_lea.vmem [#allocation7], 512
    %v727 = vld [vmem:[%s726] sm:$0xff]
    %v728 = vld [vmem:[%s726 + $0x8] sm:$0xff]
    %v729 = vld [vmem:[%s726 + $0x10] sm:$0xff]
    %v730 = vld [vmem:[%s726 + $0x18] sm:$0xff]
    %v731 = vld [vmem:[%s726 + $0x20] sm:$0xff]
    %v732 = vld [vmem:[%s726 + $0x28] sm:$0xff]
    %v733 = vld [vmem:[%s726 + $0x30] sm:$0xff]
    %v734 = vld [vmem:[%s726 + $0x38] sm:$0xff]
    %v735 = vld [vmem:[%s726 + $0x40] sm:$0xff]
    %v736 = vld [vmem:[%s726 + $0x48] sm:$0xff]
    %v737 = vld [vmem:[%s726 + $0x50] sm:$0xff]
    %v738 = vld [vmem:[%s726 + $0x58] sm:$0xff]
    %v739 = vld [vmem:[%s726 + $0x60] sm:$0xff]
    %v740 = vld [vmem:[%s726 + $0x68] sm:$0xff]
    %v741 = vld [vmem:[%s726 + $0x70] sm:$0xff]
    %v742 = vld [vmem:[%s726 + $0x78] sm:$0xff]
    %v743 = vmul.f32 %v727, %v710
    %v744 = vmul.f32 %v728, %v711
    %v745 = vmul.f32 %v729, %v712
    %v746 = vmul.f32 %v730, %v713
    %v747 = vmul.f32 %v731, %v714
    %v748 = vmul.f32 %v732, %v715
    %v749 = vmul.f32 %v733, %v716
    %v750 = vmul.f32 %v734, %v717
    %v751 = vmul.f32 %v735, %v718
    %v752 = vmul.f32 %v736, %v719
    %v753 = vmul.f32 %v737, %v720
    %v754 = vmul.f32 %v738, %v721
    %v755 = vmul.f32 %v739, %v722
    %v756 = vmul.f32 %v740, %v723
    %v757 = vmul.f32 %v741, %v724
    %v758 = vmul.f32 %v742, %v725
    %v759 = vadd.f32 %v644, %v743
    %v760 = vadd.f32 %v645, %v744
    %v761 = vadd.f32 %v646, %v745
    %v762 = vadd.f32 %v647, %v746
    %v763 = vadd.f32 %v648, %v747
    %v764 = vadd.f32 %v649, %v748
    %v765 = vadd.f32 %v650, %v749
    %v766 = vadd.f32 %v651, %v750
    %v767 = vadd.f32 %v652, %v751
    %v768 = vadd.f32 %v653, %v752
    %v769 = vadd.f32 %v654, %v753
    %v770 = vadd.f32 %v655, %v754
    %v771 = vadd.f32 %v656, %v755
    %v772 = vadd.f32 %v657, %v756
    %v773 = vadd.f32 %v658, %v757
    %v774 = vadd.f32 %v659, %v758
    %s775 = scalar_lea.vmem [#allocation2], 640
    %v776 = vld [vmem:[%s775] sm:$0xff]
    %v777 = vld [vmem:[%s775 + $0x8] sm:$0xff]
    %v778 = vld [vmem:[%s775 + $0x10] sm:$0xff]
    %v779 = vld [vmem:[%s775 + $0x18] sm:$0xff]
    %v780 = vld [vmem:[%s775 + $0x20] sm:$0xff]
    %v781 = vld [vmem:[%s775 + $0x28] sm:$0xff]
    %v782 = vld [vmem:[%s775 + $0x30] sm:$0xff]
    %v783 = vld [vmem:[%s775 + $0x38] sm:$0xff]
    %v784 = vld [vmem:[%s775 + $0x40] sm:$0xff]
    %v785 = vld [vmem:[%s775 + $0x48] sm:$0xff]
    %v786 = vld [vmem:[%s775 + $0x50] sm:$0xff]
    %v787 = vld [vmem:[%s775 + $0x58] sm:$0xff]
    %v788 = vld [vmem:[%s775 + $0x60] sm:$0xff]
    %v789 = vld [vmem:[%s775 + $0x68] sm:$0xff]
    %v790 = vld [vmem:[%s775 + $0x70] sm:$0xff]
    %v791 = vld [vmem:[%s775 + $0x78] sm:$0xff]
    %v792 = vmul.f32 %v171, %v776
    %v793 = vmul.f32 %v172, %v777
    %v794 = vmul.f32 %v173, %v778
    %v795 = vmul.f32 %v174, %v779
    %v796 = vmul.f32 %v175, %v780
    %v797 = vmul.f32 %v176, %v781
    %v798 = vmul.f32 %v177, %v782
    %v799 = vmul.f32 %v178, %v783
    %v800 = vmul.f32 %v179, %v784
    %v801 = vmul.f32 %v180, %v785
    %v802 = vmul.f32 %v181, %v786
    %v803 = vmul.f32 %v182, %v787
    %v804 = vmul.f32 %v183, %v788
    %v805 = vmul.f32 %v184, %v789
    %v806 = vmul.f32 %v185, %v790
    %v807 = vmul.f32 %v186, %v791
    %s808 = scalar_lea.vmem [#allocation5], 640
    %v809 = vld [vmem:[%s808] sm:$0xff]
    %v810 = vld [vmem:[%s808 + $0x8] sm:$0xff]
    %v811 = vld [vmem:[%s808 + $0x10] sm:$0xff]
    %v812 = vld [vmem:[%s808 + $0x18] sm:$0xff]
    %v813 = vld [vmem:[%s808 + $0x20] sm:$0xff]
    %v814 = vld [vmem:[%s808 + $0x28] sm:$0xff]
    %v815 = vld [vmem:[%s808 + $0x30] sm:$0xff]
    %v816 = vld [vmem:[%s808 + $0x38] sm:$0xff]
    %v817 = vld [vmem:[%s808 + $0x40] sm:$0xff]
    %v818 = vld [vmem:[%s808 + $0x48] sm:$0xff]
    %v819 = vld [vmem:[%s808 + $0x50] sm:$0xff]
    %v820 = vld [vmem:[%s808 + $0x58] sm:$0xff]
    %v821 = vld [vmem:[%s808 + $0x60] sm:$0xff]
    %v822 = vld [vmem:[%s808 + $0x68] sm:$0xff]
    %v823 = vld [vmem:[%s808 + $0x70] sm:$0xff]
    %v824 = vld [vmem:[%s808 + $0x78] sm:$0xff]
    %v825 = vadd.f32 %v792, %v809
    %v826 = vadd.f32 %v793, %v810
    %v827 = vadd.f32 %v794, %v811
    %v828 = vadd.f32 %v795, %v812
    %v829 = vadd.f32 %v796, %v813
    %v830 = vadd.f32 %v797, %v814
    %v831 = vadd.f32 %v798, %v815
    %v832 = vadd.f32 %v799, %v816
    %v833 = vadd.f32 %v800, %v817
    %v834 = vadd.f32 %v801, %v818
    %v835 = vadd.f32 %v802, %v819
    %v836 = vadd.f32 %v803, %v820
    %v837 = vadd.f32 %v804, %v821
    %v838 = vadd.f32 %v805, %v822
    %v839 = vadd.f32 %v806, %v823
    %v840 = vadd.f32 %v807, %v824
    %s841 = scalar_lea.vmem [#allocation7], 640
    %v842 = vld [vmem:[%s841] sm:$0xff]
    %v843 = vld [vmem:[%s841 + $0x8] sm:$0xff]
    %v844 = vld [vmem:[%s841 + $0x10] sm:$0xff]
    %v845 = vld [vmem:[%s841 + $0x18] sm:$0xff]
    %v846 = vld [vmem:[%s841 + $0x20] sm:$0xff]
    %v847 = vld [vmem:[%s841 + $0x28] sm:$0xff]
    %v848 = vld [vmem:[%s841 + $0x30] sm:$0xff]
    %v849 = vld [vmem:[%s841 + $0x38] sm:$0xff]
    %v850 = vld [vmem:[%s841 + $0x40] sm:$0xff]
    %v851 = vld [vmem:[%s841 + $0x48] sm:$0xff]
    %v852 = vld [vmem:[%s841 + $0x50] sm:$0xff]
    %v853 = vld [vmem:[%s841 + $0x58] sm:$0xff]
    %v854 = vld [vmem:[%s841 + $0x60] sm:$0xff]
    %v855 = vld [vmem:[%s841 + $0x68] sm:$0xff]
    %v856 = vld [vmem:[%s841 + $0x70] sm:$0xff]
    %v857 = vld [vmem:[%s841 + $0x78] sm:$0xff]
    %v858 = vmul.f32 %v842, %v825
    %v859 = vmul.f32 %v843, %v826
    %v860 = vmul.f32 %v844, %v827
    %v861 = vmul.f32 %v845, %v828
    %v862 = vmul.f32 %v846, %v829
    %v863 = vmul.f32 %v847, %v830
    %v864 = vmul.f32 %v848, %v831
    %v865 = vmul.f32 %v849, %v832
    %v866 = vmul.f32 %v850, %v833
    %v867 = vmul.f32 %v851, %v834
    %v868 = vmul.f32 %v852, %v835
    %v869 = vmul.f32 %v853, %v836
    %v870 = vmul.f32 %v854, %v837
    %v871 = vmul.f32 %v855, %v838
    %v872 = vmul.f32 %v856, %v839
    %v873 = vmul.f32 %v857, %v840
    %v874 = vadd.f32 %v759, %v858
    %v875 = vadd.f32 %v760, %v859
    %v876 = vadd.f32 %v761, %v860
    %v877 = vadd.f32 %v762, %v861
    %v878 = vadd.f32 %v763, %v862
    %v879 = vadd.f32 %v764, %v863
    %v880 = vadd.f32 %v765, %v864
    %v881 = vadd.f32 %v766, %v865
    %v882 = vadd.f32 %v767, %v866
    %v883 = vadd.f32 %v768, %v867
    %v884 = vadd.f32 %v769, %v868
    %v885 = vadd.f32 %v770, %v869
    %v886 = vadd.f32 %v771, %v870
    %v887 = vadd.f32 %v772, %v871
    %v888 = vadd.f32 %v773, %v872
    %v889 = vadd.f32 %v774, %v873
    %s890 = scalar_lea.vmem [#allocation2], 768
    %v891 = vld [vmem:[%s890] sm:$0xff]
    %v892 = vld [vmem:[%s890 + $0x8] sm:$0xff]
    %v893 = vld [vmem:[%s890 + $0x10] sm:$0xff]
    %v894 = vld [vmem:[%s890 + $0x18] sm:$0xff]
    %v895 = vld [vmem:[%s890 + $0x20] sm:$0xff]
    %v896 = vld [vmem:[%s890 + $0x28] sm:$0xff]
    %v897 = vld [vmem:[%s890 + $0x30] sm:$0xff]
    %v898 = vld [vmem:[%s890 + $0x38] sm:$0xff]
    %v899 = vld [vmem:[%s890 + $0x40] sm:$0xff]
    %v900 = vld [vmem:[%s890 + $0x48] sm:$0xff]
    %v901 = vld [vmem:[%s890 + $0x50] sm:$0xff]
    %v902 = vld [vmem:[%s890 + $0x58] sm:$0xff]
    %v903 = vld [vmem:[%s890 + $0x60] sm:$0xff]
    %v904 = vld [vmem:[%s890 + $0x68] sm:$0xff]
    %v905 = vld [vmem:[%s890 + $0x70] sm:$0xff]
    %v906 = vld [vmem:[%s890 + $0x78] sm:$0xff]
    %v907 = vmul.f32 %v171, %v891
    %v908 = vmul.f32 %v172, %v892
    %v909 = vmul.f32 %v173, %v893
    %v910 = vmul.f32 %v174, %v894
    %v911 = vmul.f32 %v175, %v895
    %v912 = vmul.f32 %v176, %v896
    %v913 = vmul.f32 %v177, %v897
    %v914 = vmul.f32 %v178, %v898
    %v915 = vmul.f32 %v179, %v899
    %v916 = vmul.f32 %v180, %v900
    %v917 = vmul.f32 %v181, %v901
    %v918 = vmul.f32 %v182, %v902
    %v919 = vmul.f32 %v183, %v903
    %v920 = vmul.f32 %v184, %v904
    %v921 = vmul.f32 %v185, %v905
    %v922 = vmul.f32 %v186, %v906
    %s923 = scalar_lea.vmem [#allocation5], 768
    %v924 = vld [vmem:[%s923] sm:$0xff]
    %v925 = vld [vmem:[%s923 + $0x8] sm:$0xff]
    %v926 = vld [vmem:[%s923 + $0x10] sm:$0xff]
    %v927 = vld [vmem:[%s923 + $0x18] sm:$0xff]
    %v928 = vld [vmem:[%s923 + $0x20] sm:$0xff]
    %v929 = vld [vmem:[%s923 + $0x28] sm:$0xff]
    %v930 = vld [vmem:[%s923 + $0x30] sm:$0xff]
    %v931 = vld [vmem:[%s923 + $0x38] sm:$0xff]
    %v932 = vld [vmem:[%s923 + $0x40] sm:$0xff]
    %v933 = vld [vmem:[%s923 + $0x48] sm:$0xff]
    %v934 = vld [vmem:[%s923 + $0x50] sm:$0xff]
    %v935 = vld [vmem:[%s923 + $0x58] sm:$0xff]
    %v936 = vld [vmem:[%s923 + $0x60] sm:$0xff]
    %v937 = vld [vmem:[%s923 + $0x68] sm:$0xff]
    %v938 = vld [vmem:[%s923 + $0x70] sm:$0xff]
    %v939 = vld [vmem:[%s923 + $0x78] sm:$0xff]
    %v940 = vadd.f32 %v907, %v924
    %v941 = vadd.f32 %v908, %v925
    %v942 = vadd.f32 %v909, %v926
    %v943 = vadd.f32 %v910, %v927
    %v944 = vadd.f32 %v911, %v928
    %v945 = vadd.f32 %v912, %v929
    %v946 = vadd.f32 %v913, %v930
    %v947 = vadd.f32 %v914, %v931
    %v948 = vadd.f32 %v915, %v932
    %v949 = vadd.f32 %v916, %v933
    %v950 = vadd.f32 %v917, %v934
    %v951 = vadd.f32 %v918, %v935
    %v952 = vadd.f32 %v919, %v936
    %v953 = vadd.f32 %v920, %v937
    %v954 = vadd.f32 %v921, %v938
    %v955 = vadd.f32 %v922, %v939
    %s956 = scalar_lea.vmem [#allocation7], 768
    %v957 = vld [vmem:[%s956] sm:$0xff]
    %v958 = vld [vmem:[%s956 + $0x8] sm:$0xff]
    %v959 = vld [vmem:[%s956 + $0x10] sm:$0xff]
    %v960 = vld [vmem:[%s956 + $0x18] sm:$0xff]
    %v961 = vld [vmem:[%s956 + $0x20] sm:$0xff]
    %v962 = vld [vmem:[%s956 + $0x28] sm:$0xff]
    %v963 = vld [vmem:[%s956 + $0x30] sm:$0xff]
    %v964 = vld [vmem:[%s956 + $0x38] sm:$0xff]
    %v965 = vld [vmem:[%s956 + $0x40] sm:$0xff]
    %v966 = vld [vmem:[%s956 + $0x48] sm:$0xff]
    %v967 = vld [vmem:[%s956 + $0x50] sm:$0xff]
    %v968 = vld [vmem:[%s956 + $0x58] sm:$0xff]
    %v969 = vld [vmem:[%s956 + $0x60] sm:$0xff]
    %v970 = vld [vmem:[%s956 + $0x68] sm:$0xff]
    %v971 = vld [vmem:[%s956 + $0x70] sm:$0xff]
    %v972 = vld [vmem:[%s956 + $0x78] sm:$0xff]
    %v973 = vmul.f32 %v957, %v940
    %v974 = vmul.f32 %v958, %v941
    %v975 = vmul.f32 %v959, %v942
    %v976 = vmul.f32 %v960, %v943
    %v977 = vmul.f32 %v961, %v944
    %v978 = vmul.f32 %v962, %v945
    %v979 = vmul.f32 %v963, %v946
    %v980 = vmul.f32 %v964, %v947
    %v981 = vmul.f32 %v965, %v948
    %v982 = vmul.f32 %v966, %v949
    %v983 = vmul.f32 %v967, %v950
    %v984 = vmul.f32 %v968, %v951
    %v985 = vmul.f32 %v969, %v952
    %v986 = vmul.f32 %v970, %v953
    %v987 = vmul.f32 %v971, %v954
    %v988 = vmul.f32 %v972, %v955
    %v989 = vadd.f32 %v874, %v973
    %v990 = vadd.f32 %v875, %v974
    %v991 = vadd.f32 %v876, %v975
    %v992 = vadd.f32 %v877, %v976
    %v993 = vadd.f32 %v878, %v977
    %v994 = vadd.f32 %v879, %v978
    %v995 = vadd.f32 %v880, %v979
    %v996 = vadd.f32 %v881, %v980
    %v997 = vadd.f32 %v882, %v981
    %v998 = vadd.f32 %v883, %v982
    %v999 = vadd.f32 %v884, %v983
    %v1000 = vadd.f32 %v885, %v984
    %v1001 = vadd.f32 %v886, %v985
    %v1002 = vadd.f32 %v887, %v986
    %v1003 = vadd.f32 %v888, %v987
    %v1004 = vadd.f32 %v889, %v988
    %s1005 = scalar_lea.vmem [#allocation2], 896
    %v1006 = vld [vmem:[%s1005] sm:$0xff]
    %v1007 = vld [vmem:[%s1005 + $0x8] sm:$0xff]
    %v1008 = vld [vmem:[%s1005 + $0x10] sm:$0xff]
    %v1009 = vld [vmem:[%s1005 + $0x18] sm:$0xff]
    %v1010 = vld [vmem:[%s1005 + $0x20] sm:$0xff]
    %v1011 = vld [vmem:[%s1005 + $0x28] sm:$0xff]
    %v1012 = vld [vmem:[%s1005 + $0x30] sm:$0xff]
    %v1013 = vld [vmem:[%s1005 + $0x38] sm:$0xff]
    %v1014 = vld [vmem:[%s1005 + $0x40] sm:$0xff]
    %v1015 = vld [vmem:[%s1005 + $0x48] sm:$0xff]
    %v1016 = vld [vmem:[%s1005 + $0x50] sm:$0xff]
    %v1017 = vld [vmem:[%s1005 + $0x58] sm:$0xff]
    %v1018 = vld [vmem:[%s1005 + $0x60] sm:$0xff]
    %v1019 = vld [vmem:[%s1005 + $0x68] sm:$0xff]
    %v1020 = vld [vmem:[%s1005 + $0x70] sm:$0xff]
    %v1021 = vld [vmem:[%s1005 + $0x78] sm:$0xff]
    %v1022 = vmul.f32 %v171, %v1006
    %v1023 = vmul.f32 %v172, %v1007
    %v1024 = vmul.f32 %v173, %v1008
    %v1025 = vmul.f32 %v174, %v1009
    %v1026 = vmul.f32 %v175, %v1010
    %v1027 = vmul.f32 %v176, %v1011
    %v1028 = vmul.f32 %v177, %v1012
    %v1029 = vmul.f32 %v178, %v1013
    %v1030 = vmul.f32 %v179, %v1014
    %v1031 = vmul.f32 %v180, %v1015
    %v1032 = vmul.f32 %v181, %v1016
    %v1033 = vmul.f32 %v182, %v1017
    %v1034 = vmul.f32 %v183, %v1018
    %v1035 = vmul.f32 %v184, %v1019
    %v1036 = vmul.f32 %v185, %v1020
    %v1037 = vmul.f32 %v186, %v1021
    %s1038 = scalar_lea.vmem [#allocation5], 896
    %v1039 = vld [vmem:[%s1038] sm:$0xff]
    %v1040 = vld [vmem:[%s1038 + $0x8] sm:$0xff]
    %v1041 = vld [vmem:[%s1038 + $0x10] sm:$0xff]
    %v1042 = vld [vmem:[%s1038 + $0x18] sm:$0xff]
    %v1043 = vld [vmem:[%s1038 + $0x20] sm:$0xff]
    %v1044 = vld [vmem:[%s1038 + $0x28] sm:$0xff]
    %v1045 = vld [vmem:[%s1038 + $0x30] sm:$0xff]
    %v1046 = vld [vmem:[%s1038 + $0x38] sm:$0xff]
    %v1047 = vld [vmem:[%s1038 + $0x40] sm:$0xff]
    %v1048 = vld [vmem:[%s1038 + $0x48] sm:$0xff]
    %v1049 = vld [vmem:[%s1038 + $0x50] sm:$0xff]
    %v1050 = vld [vmem:[%s1038 + $0x58] sm:$0xff]
    %v1051 = vld [vmem:[%s1038 + $0x60] sm:$0xff]
    %v1052 = vld [vmem:[%s1038 + $0x68] sm:$0xff]
    %v1053 = vld [vmem:[%s1038 + $0x70] sm:$0xff]
    %v1054 = vld [vmem:[%s1038 + $0x78] sm:$0xff]
    %v1055 = vadd.f32 %v1022, %v1039
    %v1056 = vadd.f32 %v1023, %v1040
    %v1057 = vadd.f32 %v1024, %v1041
    %v1058 = vadd.f32 %v1025, %v1042
    %v1059 = vadd.f32 %v1026, %v1043
    %v1060 = vadd.f32 %v1027, %v1044
    %v1061 = vadd.f32 %v1028, %v1045
    %v1062 = vadd.f32 %v1029, %v1046
    %v1063 = vadd.f32 %v1030, %v1047
    %v1064 = vadd.f32 %v1031, %v1048
    %v1065 = vadd.f32 %v1032, %v1049
    %v1066 = vadd.f32 %v1033, %v1050
    %v1067 = vadd.f32 %v1034, %v1051
    %v1068 = vadd.f32 %v1035, %v1052
    %v1069 = vadd.f32 %v1036, %v1053
    %v1070 = vadd.f32 %v1037, %v1054
    %s1071 = scalar_lea.vmem [#allocation7], 896
    %v1072 = vld [vmem:[%s1071] sm:$0xff]
    %v1073 = vld [vmem:[%s1071 + $0x8] sm:$0xff]
    %v1074 = vld [vmem:[%s1071 + $0x10] sm:$0xff]
    %v1075 = vld [vmem:[%s1071 + $0x18] sm:$0xff]
    %v1076 = vld [vmem:[%s1071 + $0x20] sm:$0xff]
    %v1077 = vld [vmem:[%s1071 + $0x28] sm:$0xff]
    %v1078 = vld [vmem:[%s1071 + $0x30] sm:$0xff]
    %v1079 = vld [vmem:[%s1071 + $0x38] sm:$0xff]
    %v1080 = vld [vmem:[%s1071 + $0x40] sm:$0xff]
    %v1081 = vld [vmem:[%s1071 + $0x48] sm:$0xff]
    %v1082 = vld [vmem:[%s1071 + $0x50] sm:$0xff]
    %v1083 = vld [vmem:[%s1071 + $0x58] sm:$0xff]
    %v1084 = vld [vmem:[%s1071 + $0x60] sm:$0xff]
    %v1085 = vld [vmem:[%s1071 + $0x68] sm:$0xff]
    %v1086 = vld [vmem:[%s1071 + $0x70] sm:$0xff]
    %v1087 = vld [vmem:[%s1071 + $0x78] sm:$0xff]
    %v1088 = vmul.f32 %v1072, %v1055
    %v1089 = vmul.f32 %v1073, %v1056
    %v1090 = vmul.f32 %v1074, %v1057
    %v1091 = vmul.f32 %v1075, %v1058
    %v1092 = vmul.f32 %v1076, %v1059
    %v1093 = vmul.f32 %v1077, %v1060
    %v1094 = vmul.f32 %v1078, %v1061
    %v1095 = vmul.f32 %v1079, %v1062
    %v1096 = vmul.f32 %v1080, %v1063
    %v1097 = vmul.f32 %v1081, %v1064
    %v1098 = vmul.f32 %v1082, %v1065
    %v1099 = vmul.f32 %v1083, %v1066
    %v1100 = vmul.f32 %v1084, %v1067
    %v1101 = vmul.f32 %v1085, %v1068
    %v1102 = vmul.f32 %v1086, %v1069
    %v1103 = vmul.f32 %v1087, %v1070
    %v1104 = vadd.f32 %v989, %v1088
    %v1105 = vadd.f32 %v990, %v1089
    %v1106 = vadd.f32 %v991, %v1090
    %v1107 = vadd.f32 %v992, %v1091
    %v1108 = vadd.f32 %v993, %v1092
    %v1109 = vadd.f32 %v994, %v1093
    %v1110 = vadd.f32 %v995, %v1094
    %v1111 = vadd.f32 %v996, %v1095
    %v1112 = vadd.f32 %v997, %v1096
    %v1113 = vadd.f32 %v998, %v1097
    %v1114 = vadd.f32 %v999, %v1098
    %v1115 = vadd.f32 %v1000, %v1099
    %v1116 = vadd.f32 %v1001, %v1100
    %v1117 = vadd.f32 %v1002, %v1101
    %v1118 = vadd.f32 %v1003, %v1102
    %v1119 = vadd.f32 %v1004, %v1103
    %v1120 = vld [vmem:[%s6] sm:$0x1]
    %v1122 = vlaneseq
    %v1123 = vshrl.u32 %v1122, 7
    %v1124 = vsub.s32 0, %v1123
    %v1125 = vrot.slane %v1120, %v1124
    %v1127 = vmul.f32 %v1104, %v1125
    %v1128 = vmul.f32 %v1105, %v1125
    %v1129 = vmul.f32 %v1106, %v1125
    %v1130 = vmul.f32 %v1107, %v1125
    %v1131 = vmul.f32 %v1108, %v1125
    %v1132 = vmul.f32 %v1109, %v1125
    %v1133 = vmul.f32 %v1110, %v1125
    %v1134 = vmul.f32 %v1111, %v1125
    %v1135 = vmul.f32 %v1112, %v1125
    %v1136 = vmul.f32 %v1113, %v1125
    %v1137 = vmul.f32 %v1114, %v1125
    %v1138 = vmul.f32 %v1115, %v1125
    %v1139 = vmul.f32 %v1116, %v1125
    %v1140 = vmul.f32 %v1117, %v1125
    %v1141 = vmul.f32 %v1118, %v1125
    %v1142 = vmul.f32 %v1119, %v1125
    %v1143 = vpack.c.bf16 %v1128, %v1127
    %v1144 = vpack.c.bf16 %v1130, %v1129
    %v1145 = vpack.c.bf16 %v1132, %v1131
    %v1146 = vpack.c.bf16 %v1134, %v1133
    %v1147 = vpack.c.bf16 %v1136, %v1135
    %v1148 = vpack.c.bf16 %v1138, %v1137
    %v1149 = vpack.c.bf16 %v1140, %v1139
    %v1150 = vpack.c.bf16 %v1142, %v1141
    %v1159 = vunpack.c.l.b16 %v1143
    %v1160 = vunpack.c.h.b16 %v1143
    %v1161 = vunpack.c.l.b16 %v1144
    %v1162 = vunpack.c.h.b16 %v1144
    %v1163 = vunpack.c.l.b16 %v1145
    %v1164 = vunpack.c.h.b16 %v1145
    %v1165 = vunpack.c.l.b16 %v1146
    %v1166 = vunpack.c.h.b16 %v1146
    %v1167 = vunpack.c.l.b16 %v1147
    %v1168 = vunpack.c.h.b16 %v1147
    %v1169 = vunpack.c.l.b16 %v1148
    %v1170 = vunpack.c.h.b16 %v1148
    %v1171 = vunpack.c.l.b16 %v1149
    %v1172 = vunpack.c.h.b16 %v1149
    %v1173 = vunpack.c.l.b16 %v1150
    %v1174 = vunpack.c.h.b16 %v1150
    %v1175 = vpack.c.b16 %v1159, %v1159
    %v1176 = vpack.c.b16 %v1160, %v1160
    %v1177 = vpack.c.b16 %v1161, %v1161
    %v1178 = vpack.c.b16 %v1162, %v1162
    %v1179 = vpack.c.b16 %v1163, %v1163
    %v1180 = vpack.c.b16 %v1164, %v1164
    %v1181 = vpack.c.b16 %v1165, %v1165
    %v1182 = vpack.c.b16 %v1166, %v1166
    %v1183 = vpack.c.b16 %v1167, %v1167
    %v1184 = vpack.c.b16 %v1168, %v1168
    %v1185 = vpack.c.b16 %v1169, %v1169
    %v1186 = vpack.c.b16 %v1170, %v1170
    %v1187 = vpack.c.b16 %v1171, %v1171
    %v1188 = vpack.c.b16 %v1172, %v1172
    %v1189 = vpack.c.b16 %v1173, %v1173
    %v1190 = vpack.c.b16 %v1174, %v1174
    %1207 = vst [vmem:[#allocation8] sm:$0xf] %v1175
    %1208 = vst [vmem:[#allocation8 + $0x4] sm:$0xf] %v1176
    %1209 = vst [vmem:[#allocation8 + $0x8] sm:$0xf] %v1177
    %1210 = vst [vmem:[#allocation8 + $0xc] sm:$0xf] %v1178
    %1211 = vst [vmem:[#allocation8 + $0x10] sm:$0xf] %v1179
    %1212 = vst [vmem:[#allocation8 + $0x14] sm:$0xf] %v1180
    %1213 = vst [vmem:[#allocation8 + $0x18] sm:$0xf] %v1181
    %1214 = vst [vmem:[#allocation8 + $0x1c] sm:$0xf] %v1182
    %1215 = vst [vmem:[#allocation8 + $0x20] sm:$0xf] %v1183
    %1216 = vst [vmem:[#allocation8 + $0x24] sm:$0xf] %v1184
    %1217 = vst [vmem:[#allocation8 + $0x28] sm:$0xf] %v1185
    %1218 = vst [vmem:[#allocation8 + $0x2c] sm:$0xf] %v1186
    %1219 = vst [vmem:[#allocation8 + $0x30] sm:$0xf] %v1187
    %1220 = vst [vmem:[#allocation8 + $0x34] sm:$0xf] %v1188
    %1221 = vst [vmem:[#allocation8 + $0x38] sm:$0xf] %v1189
    %1222 = vst [vmem:[#allocation8 + $0x3c] sm:$0xf] %v1190
    // Predicated region
    $region42: #{tpu_custom_call.1} parent=1 // pred_check
      _
    $region43: #{tpu_custom_call.1} parent=1 // pred_check_branch
      %1224 = sbr.rel (0) target = $region45
    $region44: #{tpu_custom_call.1} parent=1 // pred_region
      %s1226 = ssub.s32 1024, 1024
      %1227 = vsyncadd [#allocation4], %s1226
      %s1228 = sshll.u32 [#allocation8], 4
      %s1229 = int_to_ptr.vmem [resolvable:$true] %s1228
      %1234 = dma.vmem_to_hbm [thread:$0]  %s1229, 1024, %s7, [#allocation4], 64, 64, 4
    $region45: #{tpu_custom_call.1} parent=1 // pred_fallthru
      _
    // Predicated region
    $region46: #{tpu_custom_call.1} parent=1 // pred_check
      _
    $region47: #{tpu_custom_call.1} parent=1 // pred_check_branch
      %1236 = sbr.rel (0) target = $region49
    $region48: #{tpu_custom_call.1} parent=1 // pred_region
      %1237 = dma.done [#allocation4], 1024
    $region49: #{tpu_custom_call.1} parent=1 // pred_fallthru
      _
    %1238 = vsyncpa [#allocation3], 1
    %1239 = vsyncpa [#allocation6], 1
    %1240 = vsyncpa [#allocation4], 1

</llo_original>
